<compile_context>
chip_gen: v7x
topology: tpu7x:2x2x1
jax: 0.10.0
libtpu: 0.0.40
codegen_flags: <defaults>
</compile_context>

<pallas_src>
import functools

import jax
import jax.numpy as jnp
from jax import lax
from jax.experimental import pallas as pl
from jax.experimental.pallas import tpu as pltpu


def _ssm_kernel(x_ref, xp_ref, dtp_ref, dtb_ref, At_ref, D_ref, y_ref,
                dA_scr, dBu_scr, Ct_scr, h_scr,
                *, chunk, dt_rank, d_state, d_inner, d_block, unroll):
    # Hidden-state carry: reset at the first chunk of every sequence.  The
    # carry is only correct because the chunk axis (grid axis 1) is innermost
    # and marked "arbitrary" (sequential).
    @pl.when(pl.program_id(1) == 0)
    def _():
        h_scr[...] = jnp.zeros_like(h_scr)

    xb = x_ref[...]                                              # (T, d_inner)

    # ---- projections for this chunk (MXU) -----------------------------------
    x_dbl = jnp.dot(xb, xp_ref[...],
                    preferred_element_type=jnp.float32)          # (T, r + 2n)
    delta_lin = jnp.dot(x_dbl[:, :dt_rank], dtp_ref[...],
                        preferred_element_type=jnp.float32) + dtb_ref[...]
    # softplus with threshold=20 (matches torch.nn.functional.softplus)
    delta = jnp.where(delta_lin > 20.0, delta_lin,
                      jnp.log1p(jnp.exp(delta_lin)))             # (T, d_inner)

    B_c = x_dbl[:, dt_rank:dt_rank + d_state]                    # (T, n)
    C_c = x_dbl[:, dt_rank + d_state:dt_rank + 2 * d_state]      # (T, n)
    Ct_scr[...] = C_c                                            # per-step rows

    # ---- precompute dA / dBu for the whole chunk (off the serial path) ------
    # state layout: (n, d_inner) -> d_inner on the lane axis.
    A_t = At_ref[...]                                            # (n, d_inner)
    dA_scr[...] = jnp.exp(delta[:, None, :] * A_t[None, :, :])   # (T, n, d)
    du = delta * xb                                              # (T, d)
    dBu_scr[...] = du[:, None, :] * B_c[:, :, None]              # (T, n, d)

    # ---- serial scan, blocked over d_inner -----------------------------------
    #   h_t = dA_t * h_{t-1} + dBu_t ;  y[t] = C[t] @ h_t   (fused, no hs buffer)
    n_blocks = d_inner // d_block
    for blk in range(n_blocks):
        d0 = blk * d_block

        def body(i, h, _d0=d0):
            dA_t = dA_scr[i, :, _d0:_d0 + d_block]               # (n, db)
            dBu_t = dBu_scr[i, :, _d0:_d0 + d_block]             # (n, db)
            h = dA_t * h + dBu_t                                 # VPU FMA chain
            c_row = Ct_scr[pl.ds(i, 1), :]                       # (1, n)
            y_row = jnp.dot(c_row, h,
                            preferred_element_type=jnp.float32)  # (1, db) MXU
            y_ref[pl.ds(i, 1), pl.ds(_d0, d_block)] = y_row.astype(y_ref.dtype)
            return h

        h_scr[:, d0:d0 + d_block] = lax.fori_loop(
            0, chunk, body, h_scr[:, d0:d0 + d_block], unroll=unroll)

    # ---- skip connection, vectorized once per chunk --------------------------
    y_ref[...] = (y_ref[...] + xb * D_ref[...]).astype(y_ref.dtype)


def ssm_forward(x, x_proj_w_t, dt_proj_w_t, dt_proj_b, A, D, *,
                seq_chunk=None, d_block=None,
                vmem_budget_bytes=44 * 1024 * 1024):
    """x: (b, l, d_inner) f32 -> y: (b, l, d_inner) f32.

    Weights are passed pre-transposed to (in, out):
      x_proj_w_t: (d_inner, dt_rank + 2*d_state), dt_proj_w_t: (dt_rank, d_inner)
    A is the module's (d_inner, d_state) matrix (already -exp(A_log)).
    """
    b, l, d_inner = x.shape
    dt_rank = dt_proj_w_t.shape[0]
    d_state = A.shape[1]
    r2n = dt_rank + 2 * d_state

    # ---- VMEM accounting -> chunk size (f32 bytes) ---------------------------
    #   per seq row: dA + dBu scratch, C scratch, x/y stream (double-buffered)
    bytes_per_row = 4 * (2 * d_state * d_inner + d_state + 2 * 2 * d_inner)
    #   fixed: weights (double-buffered) + h carry
    fixed_bytes = 4 * 2 * (d_inner * r2n + dt_rank * d_inner
                           + 2 * d_inner + d_state * d_inner)
    row_budget = max(8, (vmem_budget_bytes - fixed_bytes) // bytes_per_row)
    if seq_chunk is None:
        cap = int(min(row_budget, 256, l))
        seq_chunk = max(c for c in range(1, cap + 1) if l % c == 0)
    assert l % seq_chunk == 0, "seq_len must be divisible by seq_chunk"
    n_chunks = l // seq_chunk

    if d_block is None:
        if d_inner <= 512:
            d_block = d_inner
        elif d_inner % 512 == 0:
            d_block = 512
        elif d_inner % 256 == 0:
            d_block = 256
        elif d_inner % 128 == 0:
            d_block = 128
        else:
            d_block = d_inner
    assert d_inner % d_block == 0

    unroll = True if seq_chunk <= 16 else 2

    A_t = jnp.asarray(A, jnp.float32).T                    # (d_state, d_inner)
    dt_b = jnp.asarray(dt_proj_b, jnp.float32).reshape(1, d_inner)
    D_row = jnp.asarray(D, jnp.float32).reshape(1, d_inner)

    kernel = functools.partial(
        _ssm_kernel, chunk=seq_chunk, dt_rank=dt_rank, d_state=d_state,
        d_inner=d_inner, d_block=d_block, unroll=unroll)

    cost = pl.CostEstimate(
        flops=int(b * l * (2 * d_inner * r2n + 2 * dt_rank * d_inner
                           + 6 * d_state * d_inner + 4 * d_inner)),
        transcendentals=int(b * l * (d_state * d_inner + 2 * d_inner)),
        bytes_accessed=int(4 * (2 * b * l * d_inner + d_inner * r2n
                                + dt_rank * d_inner + 3 * d_inner
                                + d_state * d_inner)),
    )

    return pl.pallas_call(
        kernel,
        out_shape=jax.ShapeDtypeStruct((b, l, d_inner), jnp.float32),
        grid_spec=pltpu.PrefetchScalarGridSpec(
            num_scalar_prefetch=0,
            grid=(b, n_chunks),
            in_specs=[
                pl.BlockSpec((None, seq_chunk, d_inner),
                             lambda i, c: (i, c, 0)),                   # x chunk
                pl.BlockSpec((d_inner, r2n), lambda i, c: (0, 0)),      # x_proj^T
                pl.BlockSpec((dt_rank, d_inner), lambda i, c: (0, 0)),  # dt_proj^T
                pl.BlockSpec((1, d_inner), lambda i, c: (0, 0)),        # dt bias
                pl.BlockSpec((d_state, d_inner), lambda i, c: (0, 0)),  # A^T
                pl.BlockSpec((1, d_inner), lambda i, c: (0, 0)),        # D
            ],
            out_specs=pl.BlockSpec((None, seq_chunk, d_inner),
                                   lambda i, c: (i, c, 0)),
            scratch_shapes=[
                pltpu.VMEM((seq_chunk, d_state, d_inner), jnp.float32),  # dA
                pltpu.VMEM((seq_chunk, d_state, d_inner), jnp.float32),  # dBu
                pltpu.VMEM((seq_chunk, d_state), jnp.float32),           # C rows
                pltpu.VMEM((d_state, d_inner), jnp.float32),             # h carry
            ],
        ),
        compiler_params=pltpu.CompilerParams(
            dimension_semantics=("parallel", "arbitrary"),
            vmem_limit_bytes=64 * 1024 * 1024),
        cost_estimate=cost,
    )(x, x_proj_w_t, dt_proj_w_t, dt_b, A_t, D_row)


def ssm_reference(x, x_proj_w_t, dt_proj_w_t, dt_proj_b, A, D):
    """Pure-JAX reference matching the PyTorch forward (CPU branch)."""
    b, l, d = x.shape
    n = A.shape[1]
    r = dt_proj_w_t.shape[0]
    x_dbl = x @ x_proj_w_t
    delta = jax.nn.softplus(x_dbl[..., :r] @ dt_proj_w_t + dt_proj_b.reshape(-1))
    Bm = x_dbl[..., r:r + n]
    Cm = x_dbl[..., r + n:r + 2 * n]
    dA = jnp.exp(delta[..., None] * A)                       # (b, l, d, n)
    dBu = delta[..., None] * Bm[:, :, None, :] * x[..., None]

    def step(h, inp):
        dA_i, dBu_i, C_i = inp
        h = dA_i * h + dBu_i
        y = jnp.einsum('bdn,bn->bd', h, C_i)
        return h, y

    h0 = jnp.zeros((b, d, n), jnp.float32)
    _, ys = lax.scan(step, h0, (dA.transpose(1, 0, 2, 3),
                                dBu.transpose(1, 0, 2, 3),
                                Cm.transpose(1, 0, 2)))
    return ys.transpose(1, 0, 2) + x * D.reshape(-1)


if __name__ == "__main__":
    def make_inputs(key, batch, seq_len, d_inner, dt_rank, d_state):
        k_x, k_xp, k_dtw, k_dtb = jax.random.split(key, 4)
        x = jax.random.normal(k_x, (batch, seq_len, d_inner), jnp.float32)
        # nn.Linear(d_inner, dt_rank + 2*d_state, bias=False), passed as (in, out)
        x_proj_w_t = (jax.random.normal(k_xp, (d_inner, dt_rank + 2 * d_state),
                                        jnp.float32) * 0.1)
        # nn.Linear(dt_rank, d_inner, bias=True), passed as (dt_rank, d_inner)
        dt_proj_w_t = (jax.random.normal(k_dtw, (dt_rank, d_inner),
                                         jnp.float32) * 0.1)
        dt_proj_b = (jax.random.normal(k_dtb, (1, d_inner), jnp.float32) * 0.1)
        # A_log = log(arange(1..d_state)) repeated over d_inner; A = -exp(A_log)
        A = -jnp.broadcast_to(jnp.arange(1, d_state + 1, dtype=jnp.float32),
                              (d_inner, d_state))
        D = jnp.ones((1, d_inner), jnp.float32)
        return x, x_proj_w_t, dt_proj_w_t, dt_proj_b, A, D

    key = jax.random.PRNGKey(0)
    k1, k2 = jax.random.split(key)

    # Test 1: module-consistent small shapes (single chunk, single d-block).
    args1 = make_inputs(k1, batch=2, seq_len=8, d_inner=32, dt_rank=4, d_state=8)
    y1 = jax.block_until_ready(ssm_forward(*args1))
    y1_ref = ssm_reference(*args1)
    assert y1.shape == (2, 8, 32)
    err1 = float(jnp.max(jnp.abs(y1 - y1_ref)))
    assert jnp.allclose(y1, y1_ref, atol=5e-4, rtol=5e-4), err1

    # Test 2: exercises the cross-chunk h carry (4 chunks) and d_inner blocking
    # (2 lane blocks) with the fused C contraction.
    args2 = make_inputs(k2, batch=2, seq_len=32, d_inner=256, dt_rank=4, d_state=8)
    y2 = jax.block_until_ready(ssm_forward(*args2, seq_chunk=8, d_block=128))
    y2_ref = ssm_reference(*args2)
    err2 = float(jnp.max(jnp.abs(y2 - y2_ref)))
    assert jnp.allclose(y2, y2_ref, atol=5e-4, rtol=5e-4), err2

    print("KERNEL_OK")
</pallas_src>

<mosaic_0001>
module attributes {stable_mosaic.version = 11 : i64} {
  func.func @_ssm_kernel(%arg0: i32, %arg1: i32, %arg2: memref<1x8x32xf32, #tpu.memory_space<vmem>>, %arg3: memref<32x20xf32, #tpu.memory_space<vmem>>, %arg4: memref<4x32xf32, #tpu.memory_space<vmem>>, %arg5: memref<1x32xf32, #tpu.memory_space<vmem>>, %arg6: memref<8x32xf32, #tpu.memory_space<vmem>>, %arg7: memref<1x32xf32, #tpu.memory_space<vmem>>, %arg8: memref<1x8x32xf32, #tpu.memory_space<vmem>>, %arg9: memref<8x8x32xf32, #tpu.memory_space<vmem>>, %arg10: memref<8x8x32xf32, #tpu.memory_space<vmem>>, %arg11: memref<8x8xf32, #tpu.memory_space<vmem>>, %arg12: memref<8x32xf32, #tpu.memory_space<vmem>>) attributes {dimension_semantics = [#tpu.dimension_semantics<parallel>, #tpu.dimension_semantics<arbitrary>], iteration_bounds = array<i64: 2, 1>, scalar_prefetch = 0 : i64, scratch_operands = 4 : i64, tpu.core_type = #tpu.core_type<tc>, window_params = [{transform_indices = @transform_0, window_bounds = array<i64: 1, 8, 32>}, {pipeline_mode = #tpu.pipeline_mode<synchronous>, transform_indices = @transform_1, window_bounds = array<i64: 32, 20>}, {pipeline_mode = #tpu.pipeline_mode<synchronous>, transform_indices = @transform_2, window_bounds = array<i64: 4, 32>}, {pipeline_mode = #tpu.pipeline_mode<synchronous>, transform_indices = @transform_3, window_bounds = array<i64: 1, 32>}, {pipeline_mode = #tpu.pipeline_mode<synchronous>, transform_indices = @transform_4, window_bounds = array<i64: 8, 32>}, {pipeline_mode = #tpu.pipeline_mode<synchronous>, transform_indices = @transform_5, window_bounds = array<i64: 1, 32>}, {transform_indices = @transform_6, window_bounds = array<i64: 1, 8, 32>}]} {
    %c0_i32 = arith.constant 0 : i32
    %0 = arith.cmpi eq, %arg1, %c0_i32 : i32
    %1 = arith.extui %0 : i1 to i32
    %c0_i32_0 = arith.constant 0 : i32
    %2 = arith.cmpi ne, %1, %c0_i32_0 : i32
    scf.if %2 {
      %cst_98 = arith.constant 0.000000e+00 : f32
      %167 = vector.broadcast %cst_98 : f32 to vector<8x32xf32>
      %c0_99 = arith.constant 0 : index
      %c0_100 = arith.constant 0 : index
      %168 = vector.load %arg12[%c0_99, %c0_100] : memref<8x32xf32, #tpu.memory_space<vmem>>, vector<8x32xf32>
      tpu.vector_store %arg12[%c0_99, %c0_100], %167 {strides = array<i32>} : memref<8x32xf32, #tpu.memory_space<vmem>>, vector<8x32xf32>,
    } else {
    }
    %c0 = arith.constant 0 : index
    %c0_1 = arith.constant 0 : index
    %c0_2 = arith.constant 0 : index
    %3 = vector.load %arg2[%c0, %c0_1, %c0_2] : memref<1x8x32xf32, #tpu.memory_space<vmem>>, vector<1x8x32xf32>
    %4 = vector.shape_cast %3 : vector<1x8x32xf32> to vector<8x32xf32>
    %c0_3 = arith.constant 0 : index
    %c0_4 = arith.constant 0 : index
    %5 = vector.load %arg3[%c0_3, %c0_4] : memref<32x20xf32, #tpu.memory_space<vmem>>, vector<32x20xf32>
    %cst = arith.constant dense<0.000000e+00> : vector<8x20xf32>
    %6 = tpu.matmul %4, %5, %cst {dimension_numbers = #tpu.dot_dimension_numbers<[1], [0], [0], [1], [0, 0, 1, 1], [], []>} : vector<8x32xf32>, vector<32x20xf32>, vector<8x20xf32> -> vector<8x20xf32>
    %7 = vector.extract_strided_slice %6 {offsets = [0, 0], sizes = [8, 4], strides = [1, 1]} : vector<8x20xf32> to vector<8x4xf32>
    %c0_5 = arith.constant 0 : index
    %c0_6 = arith.constant 0 : index
    %8 = vector.load %arg4[%c0_5, %c0_6] : memref<4x32xf32, #tpu.memory_space<vmem>>, vector<4x32xf32>
    %cst_7 = arith.constant dense<0.000000e+00> : vector<8x32xf32>
    %9 = tpu.matmul %7, %8, %cst_7 {dimension_numbers = #tpu.dot_dimension_numbers<[1], [0], [0], [1], [0, 0, 1, 1], [], []>} : vector<8x4xf32>, vector<4x32xf32>, vector<8x32xf32> -> vector<8x32xf32>
    %c0_8 = arith.constant 0 : index
    %c0_9 = arith.constant 0 : index
    %10 = vector.load %arg5[%c0_8, %c0_9] : memref<1x32xf32, #tpu.memory_space<vmem>>, vector<1x32xf32>
    %11 = vector.broadcast %10 : vector<1x32xf32> to vector<8x32xf32>
    %12 = arith.addf %9, %11 : vector<8x32xf32>
    %cst_10 = arith.constant 2.000000e+01 : f32
    %13 = vector.broadcast %cst_10 : f32 to vector<8x32xf32>
    %14 = arith.cmpf ogt, %12, %13 : vector<8x32xf32>
    %15 = math.exp %12 : vector<8x32xf32>
    %16 = math.log1p %15 : vector<8x32xf32>
    %17 = arith.select %14, %12, %16 : vector<8x32xi1>, vector<8x32xf32>
    %18 = vector.extract_strided_slice %6 {offsets = [0, 4], sizes = [8, 8], strides = [1, 1]} : vector<8x20xf32> to vector<8x8xf32>
    %19 = vector.extract_strided_slice %6 {offsets = [0, 12], sizes = [8, 8], strides = [1, 1]} : vector<8x20xf32> to vector<8x8xf32>
    %c0_11 = arith.constant 0 : index
    %c0_12 = arith.constant 0 : index
    %20 = vector.load %arg11[%c0_11, %c0_12] : memref<8x8xf32, #tpu.memory_space<vmem>>, vector<8x8xf32>
    tpu.vector_store %arg11[%c0_11, %c0_12], %19 {strides = array<i32>} : memref<8x8xf32, #tpu.memory_space<vmem>>, vector<8x8xf32>,
    %c0_13 = arith.constant 0 : index
    %c0_14 = arith.constant 0 : index
    %21 = vector.load %arg6[%c0_13, %c0_14] : memref<8x32xf32, #tpu.memory_space<vmem>>, vector<8x32xf32>
    %22 = vector.shape_cast %17 : vector<8x32xf32> to vector<8x1x32xf32>
    %23 = vector.shape_cast %21 : vector<8x32xf32> to vector<1x8x32xf32>
    %24 = vector.broadcast %22 : vector<8x1x32xf32> to vector<8x8x32xf32>
    %25 = vector.broadcast %23 : vector<1x8x32xf32> to vector<8x8x32xf32>
    %26 = arith.mulf %24, %25 : vector<8x8x32xf32>
    %27 = math.exp %26 : vector<8x8x32xf32>
    %c0_15 = arith.constant 0 : index
    %c0_16 = arith.constant 0 : index
    %c0_17 = arith.constant 0 : index
    %28 = vector.load %arg9[%c0_15, %c0_16, %c0_17] : memref<8x8x32xf32, #tpu.memory_space<vmem>>, vector<8x8x32xf32>
    tpu.vector_store %arg9[%c0_15, %c0_16, %c0_17], %27 {strides = array<i32>} : memref<8x8x32xf32, #tpu.memory_space<vmem>>, vector<8x8x32xf32>,
    %29 = arith.mulf %17, %4 : vector<8x32xf32>
    %30 = vector.shape_cast %29 : vector<8x32xf32> to vector<8x1x32xf32>
    %31 = vector.shape_cast %18 : vector<8x8xf32> to vector<8x8x1xf32>
    %32 = vector.broadcast %30 : vector<8x1x32xf32> to vector<8x8x32xf32>
    %33 = vector.broadcast %31 : vector<8x8x1xf32> to vector<8x8x32xf32>
    %34 = arith.mulf %32, %33 : vector<8x8x32xf32>
    %c0_18 = arith.constant 0 : index
    %c0_19 = arith.constant 0 : index
    %c0_20 = arith.constant 0 : index
    %35 = vector.load %arg10[%c0_18, %c0_19, %c0_20] : memref<8x8x32xf32, #tpu.memory_space<vmem>>, vector<8x8x32xf32>
    tpu.vector_store %arg10[%c0_18, %c0_19, %c0_20], %34 {strides = array<i32>} : memref<8x8x32xf32, #tpu.memory_space<vmem>>, vector<8x8x32xf32>,
    %c0_21 = arith.constant 0 : index
    %c0_22 = arith.constant 0 : index
    %36 = vector.load %arg12[%c0_21, %c0_22] : memref<8x32xf32, #tpu.memory_space<vmem>>, vector<8x32xf32>
    %c0_i32_23 = arith.constant 0 : i32
    %37 = arith.index_cast %c0_i32_23 : i32 to index
    %c0_24 = arith.constant 0 : index
    %c0_25 = arith.constant 0 : index
    %38 = vector.load %arg9[%37, %c0_24, %c0_25] : memref<8x8x32xf32, #tpu.memory_space<vmem>>, vector<1x8x32xf32>
    %39 = vector.shape_cast %38 : vector<1x8x32xf32> to vector<8x32xf32>
    %40 = arith.index_cast %c0_i32_23 : i32 to index
    %c0_26 = arith.constant 0 : index
    %c0_27 = arith.constant 0 : index
    %41 = vector.load %arg10[%40, %c0_26, %c0_27] : memref<8x8x32xf32, #tpu.memory_space<vmem>>, vector<1x8x32xf32>
    %42 = vector.shape_cast %41 : vector<1x8x32xf32> to vector<8x32xf32>
    %43 = arith.mulf %39, %36 : vector<8x32xf32>
    %44 = arith.addf %43, %42 : vector<8x32xf32>
    %45 = arith.index_cast %c0_i32_23 : i32 to index
    %c0_28 = arith.constant 0 : index
    %46 = vector.load %arg11[%45, %c0_28] : memref<8x8xf32, #tpu.memory_space<vmem>>, vector<1x8xf32>
    %cst_29 = arith.constant dense<0.000000e+00> : vector<1x32xf32>
    %47 = tpu.matmul %46, %44, %cst_29 {dimension_numbers = #tpu.dot_dimension_numbers<[1], [0], [0], [1], [0, 0, 1, 1], [], []>} : vector<1x8xf32>, vector<8x32xf32>, vector<1x32xf32> -> vector<1x32xf32>
    %c0_30 = arith.constant 0 : index
    %48 = arith.index_cast %c0_i32_23 : i32 to index
    %c0_31 = arith.constant 0 : index
    %49 = vector.load %arg8[%c0_30, %48, %c0_31] : memref<1x8x32xf32, #tpu.memory_space<vmem>>, vector<1x1x32xf32>
    %50 = vector.shape_cast %49 : vector<1x1x32xf32> to vector<1x32xf32>
    %51 = vector.shape_cast %47 : vector<1x32xf32> to vector<1x1x32xf32>
    tpu.vector_store %arg8[%c0_30, %48, %c0_31], %51 {strides = array<i32>} : memref<1x8x32xf32, #tpu.memory_space<vmem>>, vector<1x1x32xf32>,
    %c1_i32 = arith.constant 1 : i32
    %52 = arith.index_cast %c1_i32 : i32 to index
    %c0_32 = arith.constant 0 : index
    %c0_33 = arith.constant 0 : index
    %53 = vector.load %arg9[%52, %c0_32, %c0_33] : memref<8x8x32xf32, #tpu.memory_space<vmem>>, vector<1x8x32xf32>
    %54 = vector.shape_cast %53 : vector<1x8x32xf32> to vector<8x32xf32>
    %55 = arith.index_cast %c1_i32 : i32 to index
    %c0_34 = arith.constant 0 : index
    %c0_35 = arith.constant 0 : index
    %56 = vector.load %arg10[%55, %c0_34, %c0_35] : memref<8x8x32xf32, #tpu.memory_space<vmem>>, vector<1x8x32xf32>
    %57 = vector.shape_cast %56 : vector<1x8x32xf32> to vector<8x32xf32>
    %58 = arith.mulf %54, %44 : vector<8x32xf32>
    %59 = arith.addf %58, %57 : vector<8x32xf32>
    %60 = arith.index_cast %c1_i32 : i32 to index
    %c0_36 = arith.constant 0 : index
    %61 = vector.load %arg11[%60, %c0_36] : memref<8x8xf32, #tpu.memory_space<vmem>>, vector<1x8xf32>
    %cst_37 = arith.constant dense<0.000000e+00> : vector<1x32xf32>
    %62 = tpu.matmul %61, %59, %cst_37 {dimension_numbers = #tpu.dot_dimension_numbers<[1], [0], [0], [1], [0, 0, 1, 1], [], []>} : vector<1x8xf32>, vector<8x32xf32>, vector<1x32xf32> -> vector<1x32xf32>
    %c0_38 = arith.constant 0 : index
    %63 = arith.index_cast %c1_i32 : i32 to index
    %c0_39 = arith.constant 0 : index
    %64 = vector.load %arg8[%c0_38, %63, %c0_39] : memref<1x8x32xf32, #tpu.memory_space<vmem>>, vector<1x1x32xf32>
    %65 = vector.shape_cast %64 : vector<1x1x32xf32> to vector<1x32xf32>
    %66 = vector.shape_cast %62 : vector<1x32xf32> to vector<1x1x32xf32>
    tpu.vector_store %arg8[%c0_38, %63, %c0_39], %66 {strides = array<i32>} : memref<1x8x32xf32, #tpu.memory_space<vmem>>, vector<1x1x32xf32>,
    %c2_i32 = arith.constant 2 : i32
    %67 = arith.index_cast %c2_i32 : i32 to index
    %c0_40 = arith.constant 0 : index
    %c0_41 = arith.constant 0 : index
    %68 = vector.load %arg9[%67, %c0_40, %c0_41] : memref<8x8x32xf32, #tpu.memory_space<vmem>>, vector<1x8x32xf32>
    %69 = vector.shape_cast %68 : vector<1x8x32xf32> to vector<8x32xf32>
    %70 = arith.index_cast %c2_i32 : i32 to index
    %c0_42 = arith.constant 0 : index
    %c0_43 = arith.constant 0 : index
    %71 = vector.load %arg10[%70, %c0_42, %c0_43] : memref<8x8x32xf32, #tpu.memory_space<vmem>>, vector<1x8x32xf32>
    %72 = vector.shape_cast %71 : vector<1x8x32xf32> to vector<8x32xf32>
    %73 = arith.mulf %69, %59 : vector<8x32xf32>
    %74 = arith.addf %73, %72 : vector<8x32xf32>
    %75 = arith.index_cast %c2_i32 : i32 to index
    %c0_44 = arith.constant 0 : index
    %76 = vector.load %arg11[%75, %c0_44] : memref<8x8xf32, #tpu.memory_space<vmem>>, vector<1x8xf32>
    %cst_45 = arith.constant dense<0.000000e+00> : vector<1x32xf32>
    %77 = tpu.matmul %76, %74, %cst_45 {dimension_numbers = #tpu.dot_dimension_numbers<[1], [0], [0], [1], [0, 0, 1, 1], [], []>} : vector<1x8xf32>, vector<8x32xf32>, vector<1x32xf32> -> vector<1x32xf32>
    %c0_46 = arith.constant 0 : index
    %78 = arith.index_cast %c2_i32 : i32 to index
    %c0_47 = arith.constant 0 : index
    %79 = vector.load %arg8[%c0_46, %78, %c0_47] : memref<1x8x32xf32, #tpu.memory_space<vmem>>, vector<1x1x32xf32>
    %80 = vector.shape_cast %79 : vector<1x1x32xf32> to vector<1x32xf32>
    %81 = vector.shape_cast %77 : vector<1x32xf32> to vector<1x1x32xf32>
    tpu.vector_store %arg8[%c0_46, %78, %c0_47], %81 {strides = array<i32>} : memref<1x8x32xf32, #tpu.memory_space<vmem>>, vector<1x1x32xf32>,
    %c3_i32 = arith.constant 3 : i32
    %82 = arith.index_cast %c3_i32 : i32 to index
    %c0_48 = arith.constant 0 : index
    %c0_49 = arith.constant 0 : index
    %83 = vector.load %arg9[%82, %c0_48, %c0_49] : memref<8x8x32xf32, #tpu.memory_space<vmem>>, vector<1x8x32xf32>
    %84 = vector.shape_cast %83 : vector<1x8x32xf32> to vector<8x32xf32>
    %85 = arith.index_cast %c3_i32 : i32 to index
    %c0_50 = arith.constant 0 : index
    %c0_51 = arith.constant 0 : index
    %86 = vector.load %arg10[%85, %c0_50, %c0_51] : memref<8x8x32xf32, #tpu.memory_space<vmem>>, vector<1x8x32xf32>
    %87 = vector.shape_cast %86 : vector<1x8x32xf32> to vector<8x32xf32>
    %88 = arith.mulf %84, %74 : vector<8x32xf32>
    %89 = arith.addf %88, %87 : vector<8x32xf32>
    %90 = arith.index_cast %c3_i32 : i32 to index
    %c0_52 = arith.constant 0 : index
    %91 = vector.load %arg11[%90, %c0_52] : memref<8x8xf32, #tpu.memory_space<vmem>>, vector<1x8xf32>
    %cst_53 = arith.constant dense<0.000000e+00> : vector<1x32xf32>
    %92 = tpu.matmul %91, %89, %cst_53 {dimension_numbers = #tpu.dot_dimension_numbers<[1], [0], [0], [1], [0, 0, 1, 1], [], []>} : vector<1x8xf32>, vector<8x32xf32>, vector<1x32xf32> -> vector<1x32xf32>
    %c0_54 = arith.constant 0 : index
    %93 = arith.index_cast %c3_i32 : i32 to index
    %c0_55 = arith.constant 0 : index
    %94 = vector.load %arg8[%c0_54, %93, %c0_55] : memref<1x8x32xf32, #tpu.memory_space<vmem>>, vector<1x1x32xf32>
    %95 = vector.shape_cast %94 : vector<1x1x32xf32> to vector<1x32xf32>
    %96 = vector.shape_cast %92 : vector<1x32xf32> to vector<1x1x32xf32>
    tpu.vector_store %arg8[%c0_54, %93, %c0_55], %96 {strides = array<i32>} : memref<1x8x32xf32, #tpu.memory_space<vmem>>, vector<1x1x32xf32>,
    %c4_i32 = arith.constant 4 : i32
    %97 = arith.index_cast %c4_i32 : i32 to index
    %c0_56 = arith.constant 0 : index
    %c0_57 = arith.constant 0 : index
    %98 = vector.load %arg9[%97, %c0_56, %c0_57] : memref<8x8x32xf32, #tpu.memory_space<vmem>>, vector<1x8x32xf32>
    %99 = vector.shape_cast %98 : vector<1x8x32xf32> to vector<8x32xf32>
    %100 = arith.index_cast %c4_i32 : i32 to index
    %c0_58 = arith.constant 0 : index
    %c0_59 = arith.constant 0 : index
    %101 = vector.load %arg10[%100, %c0_58, %c0_59] : memref<8x8x32xf32, #tpu.memory_space<vmem>>, vector<1x8x32xf32>
    %102 = vector.shape_cast %101 : vector<1x8x32xf32> to vector<8x32xf32>
    %103 = arith.mulf %99, %89 : vector<8x32xf32>
    %104 = arith.addf %103, %102 : vector<8x32xf32>
    %105 = arith.index_cast %c4_i32 : i32 to index
    %c0_60 = arith.constant 0 : index
    %106 = vector.load %arg11[%105, %c0_60] : memref<8x8xf32, #tpu.memory_space<vmem>>, vector<1x8xf32>
    %cst_61 = arith.constant dense<0.000000e+00> : vector<1x32xf32>
    %107 = tpu.matmul %106, %104, %cst_61 {dimension_numbers = #tpu.dot_dimension_numbers<[1], [0], [0], [1], [0, 0, 1, 1], [], []>} : vector<1x8xf32>, vector<8x32xf32>, vector<1x32xf32> -> vector<1x32xf32>
    %c0_62 = arith.constant 0 : index
    %108 = arith.index_cast %c4_i32 : i32 to index
    %c0_63 = arith.constant 0 : index
    %109 = vector.load %arg8[%c0_62, %108, %c0_63] : memref<1x8x32xf32, #tpu.memory_space<vmem>>, vector<1x1x32xf32>
    %110 = vector.shape_cast %109 : vector<1x1x32xf32> to vector<1x32xf32>
    %111 = vector.shape_cast %107 : vector<1x32xf32> to vector<1x1x32xf32>
    tpu.vector_store %arg8[%c0_62, %108, %c0_63], %111 {strides = array<i32>} : memref<1x8x32xf32, #tpu.memory_space<vmem>>, vector<1x1x32xf32>,
    %c5_i32 = arith.constant 5 : i32
    %112 = arith.index_cast %c5_i32 : i32 to index
    %c0_64 = arith.constant 0 : index
    %c0_65 = arith.constant 0 : index
    %113 = vector.load %arg9[%112, %c0_64, %c0_65] : memref<8x8x32xf32, #tpu.memory_space<vmem>>, vector<1x8x32xf32>
    %114 = vector.shape_cast %113 : vector<1x8x32xf32> to vector<8x32xf32>
    %115 = arith.index_cast %c5_i32 : i32 to index
    %c0_66 = arith.constant 0 : index
    %c0_67 = arith.constant 0 : index
    %116 = vector.load %arg10[%115, %c0_66, %c0_67] : memref<8x8x32xf32, #tpu.memory_space<vmem>>, vector<1x8x32xf32>
    %117 = vector.shape_cast %116 : vector<1x8x32xf32> to vector<8x32xf32>
    %118 = arith.mulf %114, %104 : vector<8x32xf32>
    %119 = arith.addf %118, %117 : vector<8x32xf32>
    %120 = arith.index_cast %c5_i32 : i32 to index
    %c0_68 = arith.constant 0 : index
    %121 = vector.load %arg11[%120, %c0_68] : memref<8x8xf32, #tpu.memory_space<vmem>>, vector<1x8xf32>
    %cst_69 = arith.constant dense<0.000000e+00> : vector<1x32xf32>
    %122 = tpu.matmul %121, %119, %cst_69 {dimension_numbers = #tpu.dot_dimension_numbers<[1], [0], [0], [1], [0, 0, 1, 1], [], []>} : vector<1x8xf32>, vector<8x32xf32>, vector<1x32xf32> -> vector<1x32xf32>
    %c0_70 = arith.constant 0 : index
    %123 = arith.index_cast %c5_i32 : i32 to index
    %c0_71 = arith.constant 0 : index
    %124 = vector.load %arg8[%c0_70, %123, %c0_71] : memref<1x8x32xf32, #tpu.memory_space<vmem>>, vector<1x1x32xf32>
    %125 = vector.shape_cast %124 : vector<1x1x32xf32> to vector<1x32xf32>
    %126 = vector.shape_cast %122 : vector<1x32xf32> to vector<1x1x32xf32>
    tpu.vector_store %arg8[%c0_70, %123, %c0_71], %126 {strides = array<i32>} : memref<1x8x32xf32, #tpu.memory_space<vmem>>, vector<1x1x32xf32>,
    %c6_i32 = arith.constant 6 : i32
    %127 = arith.index_cast %c6_i32 : i32 to index
    %c0_72 = arith.constant 0 : index
    %c0_73 = arith.constant 0 : index
    %128 = vector.load %arg9[%127, %c0_72, %c0_73] : memref<8x8x32xf32, #tpu.memory_space<vmem>>, vector<1x8x32xf32>
    %129 = vector.shape_cast %128 : vector<1x8x32xf32> to vector<8x32xf32>
    %130 = arith.index_cast %c6_i32 : i32 to index
    %c0_74 = arith.constant 0 : index
    %c0_75 = arith.constant 0 : index
    %131 = vector.load %arg10[%130, %c0_74, %c0_75] : memref<8x8x32xf32, #tpu.memory_space<vmem>>, vector<1x8x32xf32>
    %132 = vector.shape_cast %131 : vector<1x8x32xf32> to vector<8x32xf32>
    %133 = arith.mulf %129, %119 : vector<8x32xf32>
    %134 = arith.addf %133, %132 : vector<8x32xf32>
    %135 = arith.index_cast %c6_i32 : i32 to index
    %c0_76 = arith.constant 0 : index
    %136 = vector.load %arg11[%135, %c0_76] : memref<8x8xf32, #tpu.memory_space<vmem>>, vector<1x8xf32>
    %cst_77 = arith.constant dense<0.000000e+00> : vector<1x32xf32>
    %137 = tpu.matmul %136, %134, %cst_77 {dimension_numbers = #tpu.dot_dimension_numbers<[1], [0], [0], [1], [0, 0, 1, 1], [], []>} : vector<1x8xf32>, vector<8x32xf32>, vector<1x32xf32> -> vector<1x32xf32>
    %c0_78 = arith.constant 0 : index
    %138 = arith.index_cast %c6_i32 : i32 to index
    %c0_79 = arith.constant 0 : index
    %139 = vector.load %arg8[%c0_78, %138, %c0_79] : memref<1x8x32xf32, #tpu.memory_space<vmem>>, vector<1x1x32xf32>
    %140 = vector.shape_cast %139 : vector<1x1x32xf32> to vector<1x32xf32>
    %141 = vector.shape_cast %137 : vector<1x32xf32> to vector<1x1x32xf32>
    tpu.vector_store %arg8[%c0_78, %138, %c0_79], %141 {strides = array<i32>} : memref<1x8x32xf32, #tpu.memory_space<vmem>>, vector<1x1x32xf32>,
    %c7_i32 = arith.constant 7 : i32
    %142 = arith.index_cast %c7_i32 : i32 to index
    %c0_80 = arith.constant 0 : index
    %c0_81 = arith.constant 0 : index
    %143 = vector.load %arg9[%142, %c0_80, %c0_81] : memref<8x8x32xf32, #tpu.memory_space<vmem>>, vector<1x8x32xf32>
    %144 = vector.shape_cast %143 : vector<1x8x32xf32> to vector<8x32xf32>
    %145 = arith.index_cast %c7_i32 : i32 to index
    %c0_82 = arith.constant 0 : index
    %c0_83 = arith.constant 0 : index
    %146 = vector.load %arg10[%145, %c0_82, %c0_83] : memref<8x8x32xf32, #tpu.memory_space<vmem>>, vector<1x8x32xf32>
    %147 = vector.shape_cast %146 : vector<1x8x32xf32> to vector<8x32xf32>
    %148 = arith.mulf %144, %134 : vector<8x32xf32>
    %149 = arith.addf %148, %147 : vector<8x32xf32>
    %150 = arith.index_cast %c7_i32 : i32 to index
    %c0_84 = arith.constant 0 : index
    %151 = vector.load %arg11[%150, %c0_84] : memref<8x8xf32, #tpu.memory_space<vmem>>, vector<1x8xf32>
    %cst_85 = arith.constant dense<0.000000e+00> : vector<1x32xf32>
    %152 = tpu.matmul %151, %149, %cst_85 {dimension_numbers = #tpu.dot_dimension_numbers<[1], [0], [0], [1], [0, 0, 1, 1], [], []>} : vector<1x8xf32>, vector<8x32xf32>, vector<1x32xf32> -> vector<1x32xf32>
    %c0_86 = arith.constant 0 : index
    %153 = arith.index_cast %c7_i32 : i32 to index
    %c0_87 = arith.constant 0 : index
    %154 = vector.load %arg8[%c0_86, %153, %c0_87] : memref<1x8x32xf32, #tpu.memory_space<vmem>>, vector<1x1x32xf32>
    %155 = vector.shape_cast %154 : vector<1x1x32xf32> to vector<1x32xf32>
    %156 = vector.shape_cast %152 : vector<1x32xf32> to vector<1x1x32xf32>
    tpu.vector_store %arg8[%c0_86, %153, %c0_87], %156 {strides = array<i32>} : memref<1x8x32xf32, #tpu.memory_space<vmem>>, vector<1x1x32xf32>,
    %c8_i32 = arith.constant 8 : i32
    %c0_88 = arith.constant 0 : index
    %c0_89 = arith.constant 0 : index
    %157 = vector.load %arg12[%c0_88, %c0_89] : memref<8x32xf32, #tpu.memory_space<vmem>>, vector<8x32xf32>
    tpu.vector_store %arg12[%c0_88, %c0_89], %149 {strides = array<i32>} : memref<8x32xf32, #tpu.memory_space<vmem>>, vector<8x32xf32>,
    %c0_90 = arith.constant 0 : index
    %c0_91 = arith.constant 0 : index
    %c0_92 = arith.constant 0 : index
    %158 = vector.load %arg8[%c0_90, %c0_91, %c0_92] : memref<1x8x32xf32, #tpu.memory_space<vmem>>, vector<1x8x32xf32>
    %159 = vector.shape_cast %158 : vector<1x8x32xf32> to vector<8x32xf32>
    %c0_93 = arith.constant 0 : index
    %c0_94 = arith.constant 0 : index
    %160 = vector.load %arg7[%c0_93, %c0_94] : memref<1x32xf32, #tpu.memory_space<vmem>>, vector<1x32xf32>
    %161 = vector.broadcast %160 : vector<1x32xf32> to vector<8x32xf32>
    %162 = arith.mulf %4, %161 : vector<8x32xf32>
    %163 = arith.addf %159, %162 : vector<8x32xf32>
    %c0_95 = arith.constant 0 : index
    %c0_96 = arith.constant 0 : index
    %c0_97 = arith.constant 0 : index
    %164 = vector.load %arg8[%c0_95, %c0_96, %c0_97] : memref<1x8x32xf32, #tpu.memory_space<vmem>>, vector<1x8x32xf32>
    %165 = vector.shape_cast %164 : vector<1x8x32xf32> to vector<8x32xf32>
    %166 = vector.shape_cast %163 : vector<8x32xf32> to vector<1x8x32xf32>
    tpu.vector_store %arg8[%c0_95, %c0_96, %c0_97], %166 {strides = array<i32>} : memref<1x8x32xf32, #tpu.memory_space<vmem>>, vector<1x8x32xf32>,
    return
  }
  func.func @transform_0(%arg0: i32, %arg1: i32) -> (i32, i32, i32) {
    %c0_i32 = arith.constant 0 : i32
    %c0_i32_0 = arith.constant 0 : i32
    return %arg0, %arg1, %c0_i32 : i32, i32, i32
  }
  func.func @transform_1(%arg0: i32, %arg1: i32) -> (i32, i32) {
    %c0_i32 = arith.constant 0 : i32
    %c0_i32_0 = arith.constant 0 : i32
    %c0_i32_1 = arith.constant 0 : i32
    return %c0_i32, %c0_i32_0 : i32, i32
  }
  func.func @transform_2(%arg0: i32, %arg1: i32) -> (i32, i32) {
    %c0_i32 = arith.constant 0 : i32
    %c0_i32_0 = arith.constant 0 : i32
    %c0_i32_1 = arith.constant 0 : i32
    return %c0_i32, %c0_i32_0 : i32, i32
  }
  func.func @transform_3(%arg0: i32, %arg1: i32) -> (i32, i32) {
    %c0_i32 = arith.constant 0 : i32
    %c0_i32_0 = arith.constant 0 : i32
    %c0_i32_1 = arith.constant 0 : i32
    return %c0_i32, %c0_i32_0 : i32, i32
  }
  func.func @transform_4(%arg0: i32, %arg1: i32) -> (i32, i32) {
    %c0_i32 = arith.constant 0 : i32
    %c0_i32_0 = arith.constant 0 : i32
    %c0_i32_1 = arith.constant 0 : i32
    return %c0_i32, %c0_i32_0 : i32, i32
  }
  func.func @transform_5(%arg0: i32, %arg1: i32) -> (i32, i32) {
    %c0_i32 = arith.constant 0 : i32
    %c0_i32_0 = arith.constant 0 : i32
    %c0_i32_1 = arith.constant 0 : i32
    return %c0_i32, %c0_i32_0 : i32, i32
  }
  func.func @transform_6(%arg0: i32, %arg1: i32) -> (i32, i32, i32) {
    %c0_i32 = arith.constant 0 : i32
    %c0_i32_0 = arith.constant 0 : i32
    return %arg0, %arg1, %c0_i32 : i32, i32, i32
  }
}

</mosaic_0001>

<llo_original>
// kernel: tpu_custom_call.1
$region0: #{tpu_custom_call.1}
  #allocation0 [shape = 'u32[]', space=smem, size = 0x4, offset = 0x4, fixed_abs, tag = 'smem constant byte address 0x4 - core index']
  #allocation1 [shape = 'u32[144,128]{1,0:T(1,128)}', space=vmem, size = 0x12000, scoped, tag = 'internal scratch']
  #allocation2 [shape = 'f32[8,8,32]{2,1,0:T(8,128)}', space=vmem, size = 0x8000, scoped, tag = 'scratch operand']
  #allocation3 [shape = 'f32[8,8,32]{2,1,0:T(8,128)}', space=vmem, size = 0x8000, scoped, tag = 'scratch operand']
  #allocation4 [shape = 'f32[8,8]{1,0:T(8,128)}', space=vmem, size = 0x1000, scoped, tag = 'scratch operand']
  #allocation5 [shape = 'f32[8,32]{1,0:T(8,128)}', space=vmem, size = 0x1000, scoped, tag = 'scratch operand']
  %s0 = inlined_call_operand.hbm [shape: f32[2,8,32], index: 0, kind: input, shape index: {}]
  %s1 = inlined_call_operand.hbm [shape: f32[32,20], index: 1, kind: input, shape index: {}]
  %s2 = inlined_call_operand.hbm [shape: f32[4,32], index: 2, kind: input, shape index: {}]
  %s3 = inlined_call_operand.hbm [shape: f32[1,32], index: 3, kind: input, shape index: {}]
  %s4 = inlined_call_operand.hbm [shape: f32[8,32], index: 4, kind: input, shape index: {}]
  %s5 = inlined_call_operand.hbm [shape: f32[1,32], index: 5, kind: input, shape index: {}]
  %s6 = inlined_call_operand.hbm [shape: f32[2,8,32], index: 6, kind: output, shape index: {}]
  %s7 = sld [smem:[#allocation0]]
  $region85: #{tpu_custom_call.1} parent=0
    _
  %s9 = ssub.s32 1, %s7
  %s10 = scalar_select 0, %s9, %s7
  $region1: #{tpu_custom_call.1} parent=0
    #allocation6 [shape = 'u8[8192]{0}', space=vmem, size = 0x2000, scoped, tag = 'input window, operand 0']
    #allocation7 [shape = 's32[2]{0}', space=sflag, size = 0x8, scoped, tag = 'scoped memory for tpu_custom_call.1']
    #allocation8 [shape = 's32[2]{0}', space=sflag, size = 0x8, scoped, tag = 'scoped memory for tpu_custom_call.1']
    #allocation9 [shape = 'u8[16384]{0}', space=vmem, size = 0x4000, scoped, tag = 'input window, operand 1, single buffered']
    #allocation10 [shape = 's32[1]{0}', space=sflag, size = 0x4, scoped, tag = 'scoped memory for tpu_custom_call.1']
    #allocation11 [shape = 'u8[2048]{0}', space=vmem, size = 0x800, scoped, tag = 'input window, operand 2, single buffered']
    #allocation12 [shape = 'u8[512]{0}', space=vmem, size = 0x400, scoped, tag = 'input window, operand 3, single buffered']
    #allocation13 [shape = 's32[1]{0}', space=sflag, size = 0x4, scoped, tag = 'scoped memory for tpu_custom_call.1']
    #allocation14 [shape = 'u8[4096]{0}', space=vmem, size = 0x1000, scoped, tag = 'input window, operand 4, single buffered']
    #allocation15 [shape = 'u8[512]{0}', space=vmem, size = 0x400, scoped, tag = 'input window, operand 5, single buffered']
    #allocation16 [shape = 's32[1]{0}', space=sflag, size = 0x4, scoped, tag = 'scoped memory for tpu_custom_call.1']
    #allocation17 [shape = 'u8[8192]{0}', space=vmem, size = 0x2000, scoped, tag = 'output window, operand 0']
    %11 = vsyncpa [#allocation7], 0
    %s12 = scalar_lea.sflag [#allocation7], 1
    %13 = vsyncpa %s12, 0
    %14 = vsyncpa [#allocation10], 0
    %15 = vsyncpa [#allocation13], 0
    %16 = vsyncpa [#allocation16], 0
    %17 = vsyncpa [#allocation8], 0
    %s18 = scalar_lea.sflag [#allocation8], 1
    %19 = vsyncpa %s18, 0
    loop: start=0, step=1, limit=4
    $region2: #{tpu_custom_call.1} parent=1 // loop_pre_header
      _
    $region3: #{tpu_custom_call.1} parent=1 // loop_header
      %s21 = sphi 0, %s25
      %p22 = scmp.ge.s32.totalorder %s21, 4
      %s28 = sphi 0, %s40
      %s29 = sphi 0, %s36
      %s30 = sphi 0, %s28
      %s31 = sphi 0, %s29
      %s32 = sphi 0, %s30
      %s33 = sphi 0, %s31
      %s45 = sphi 0, %s47
      %s48 = sphi 0, %s45
      %s49 = sphi 0, %s48
      %s65 = sphi 0, %s49
      %s69 = sphi 0, %s69
      %s71 = sphi 0, %s69
      %s72 = sphi 0, %s71
      %s86 = sphi 0, %s72
      %s90 = sphi 0, %s90
      %s92 = sphi 0, %s90
      %s93 = sphi 0, %s92
      %s107 = sphi 0, %s93
      %s111 = sphi 0, %s111
      %s113 = sphi 0, %s111
      %s114 = sphi 0, %s113
      %s128 = sphi 0, %s114
      %s132 = sphi 0, %s132
      %s134 = sphi 0, %s132
      %s135 = sphi 0, %s134
      %s149 = sphi 0, %s135
      %s153 = sphi 0, %s153
      %s155 = sphi 0, %s153
      %s156 = sphi 0, %s155
      %s170 = sphi 0, %s156
      %s178 = sphi 0, %s180
      %s181 = sphi 0, %s178
      %s182 = sphi 0, %s181
      %s198 = sphi 0, %s182
    $region4: #{tpu_custom_call.1} parent=1 // loop_header_branch
      %24 = sbr.rel (%p22) target = $region8
    $region5: #{tpu_custom_call.1} parent=1 // loop_body
      %s26 = ssub.s32 %s21, 1
      %s27 = ssub.s32 %s21, 2
      %s34 = sadd.s32 1, %s29
      %p35 = scmp.ge.s32.totalorder %s34, 1
      %s36 = scalar_select %p35, 0, %s34
      %s37 = sadd.s32 1, %s28
      %s38 = scalar_select %p35, %s37, %s28
      %p39 = scmp.ge.s32.totalorder %s38, 2
      %s40 = scalar_select %p39, 0, %s38
      %s41 = ssub.s32 %s28, %s40
      %s42 = ssub.s32 %s29, %s36
      %s43 = sor.u32 %s41, %s42
      %p44 = scmp.eq.s32.totalorder %s43, 0
      %s46 = sadd.s32 %s45, 1
      %s47 = scalar_select %p44, %s45, %s46
      %p50 = pneg %p44
      %p51 = scmp.eq.s32.totalorder %s21, 1
      %p52 = por %p50, %p51
      %p53 = scmp.ne.s32.totalorder %s45, %s48
      %p54 = scmp.eq.s32.totalorder %s21, 0
      %p55 = por %p53, %p54
      %p56 = scmp.ne.s32.totalorder %s45, %s48
      %p57 = scmp.eq.s32.totalorder %s26, 1
      %p58 = por %p56, %p57
      %p59 = scmp.ne.s32.totalorder %s48, %s49
      %p60 = scmp.eq.s32.totalorder %s26, 0
      %p61 = por %p59, %p60
      %p62 = scmp.ne.s32.totalorder %s48, %s49
      %p63 = scmp.eq.s32.totalorder %s27, 1
      %p64 = por %p62, %p63
      %p66 = scmp.ne.s32.totalorder %s49, %s65
      %p67 = scmp.eq.s32.totalorder %s27, 0
      %p68 = por %p66, %p67
      %s70 = sadd.s32 %s69, 1
      %p73 = scmp.eq.s32.totalorder %s21, 1
      %p74 = scmp.ne.s32.totalorder %s69, %s71
      %p75 = scmp.eq.s32.totalorder %s21, 0
      %p76 = por %p74, %p75
      %p77 = scmp.ne.s32.totalorder %s69, %s71
      %p78 = scmp.eq.s32.totalorder %s26, 1
      %p79 = por %p77, %p78
      %p80 = scmp.ne.s32.totalorder %s71, %s72
      %p81 = scmp.eq.s32.totalorder %s26, 0
      %p82 = por %p80, %p81
      %p83 = scmp.ne.s32.totalorder %s71, %s72
      %p84 = scmp.eq.s32.totalorder %s27, 1
      %p85 = por %p83, %p84
      %p87 = scmp.ne.s32.totalorder %s72, %s86
      %p88 = scmp.eq.s32.totalorder %s27, 0
      %p89 = por %p87, %p88
      %s91 = sadd.s32 %s90, 1
      %p94 = scmp.eq.s32.totalorder %s21, 1
      %p95 = scmp.ne.s32.totalorder %s90, %s92
      %p96 = scmp.eq.s32.totalorder %s21, 0
      %p97 = por %p95, %p96
      %p98 = scmp.ne.s32.totalorder %s90, %s92
      %p99 = scmp.eq.s32.totalorder %s26, 1
      %p100 = por %p98, %p99
      %p101 = scmp.ne.s32.totalorder %s92, %s93
      %p102 = scmp.eq.s32.totalorder %s26, 0
      %p103 = por %p101, %p102
      %p104 = scmp.ne.s32.totalorder %s92, %s93
      %p105 = scmp.eq.s32.totalorder %s27, 1
      %p106 = por %p104, %p105
      %p108 = scmp.ne.s32.totalorder %s93, %s107
      %p109 = scmp.eq.s32.totalorder %s27, 0
      %p110 = por %p108, %p109
      %s112 = sadd.s32 %s111, 1
      %p115 = scmp.eq.s32.totalorder %s21, 1
      %p116 = scmp.ne.s32.totalorder %s111, %s113
      %p117 = scmp.eq.s32.totalorder %s21, 0
      %p118 = por %p116, %p117
      %p119 = scmp.ne.s32.totalorder %s111, %s113
      %p120 = scmp.eq.s32.totalorder %s26, 1
      %p121 = por %p119, %p120
      %p122 = scmp.ne.s32.totalorder %s113, %s114
      %p123 = scmp.eq.s32.totalorder %s26, 0
      %p124 = por %p122, %p123
      %p125 = scmp.ne.s32.totalorder %s113, %s114
      %p126 = scmp.eq.s32.totalorder %s27, 1
      %p127 = por %p125, %p126
      %p129 = scmp.ne.s32.totalorder %s114, %s128
      %p130 = scmp.eq.s32.totalorder %s27, 0
      %p131 = por %p129, %p130
      %s133 = sadd.s32 %s132, 1
      %p136 = scmp.eq.s32.totalorder %s21, 1
      %p137 = scmp.ne.s32.totalorder %s132, %s134
      %p138 = scmp.eq.s32.totalorder %s21, 0
      %p139 = por %p137, %p138
      %p140 = scmp.ne.s32.totalorder %s132, %s134
      %p141 = scmp.eq.s32.totalorder %s26, 1
      %p142 = por %p140, %p141
      %p143 = scmp.ne.s32.totalorder %s134, %s135
      %p144 = scmp.eq.s32.totalorder %s26, 0
      %p145 = por %p143, %p144
      %p146 = scmp.ne.s32.totalorder %s134, %s135
      %p147 = scmp.eq.s32.totalorder %s27, 1
      %p148 = por %p146, %p147
      %p150 = scmp.ne.s32.totalorder %s135, %s149
      %p151 = scmp.eq.s32.totalorder %s27, 0
      %p152 = por %p150, %p151
      %s154 = sadd.s32 %s153, 1
      %p157 = scmp.eq.s32.totalorder %s21, 1
      %p158 = scmp.ne.s32.totalorder %s153, %s155
      %p159 = scmp.eq.s32.totalorder %s21, 0
      %p160 = por %p158, %p159
      %p161 = scmp.ne.s32.totalorder %s153, %s155
      %p162 = scmp.eq.s32.totalorder %s26, 1
      %p163 = por %p161, %p162
      %p164 = scmp.ne.s32.totalorder %s155, %s156
      %p165 = scmp.eq.s32.totalorder %s26, 0
      %p166 = por %p164, %p165
      %p167 = scmp.ne.s32.totalorder %s155, %s156
      %p168 = scmp.eq.s32.totalorder %s27, 1
      %p169 = por %p167, %p168
      %p171 = scmp.ne.s32.totalorder %s156, %s170
      %p172 = scmp.eq.s32.totalorder %s27, 0
      %p173 = por %p171, %p172
      %s174 = ssub.s32 %s28, %s40
      %s175 = ssub.s32 %s29, %s36
      %s176 = sor.u32 %s174, %s175
      %p177 = scmp.eq.s32.totalorder %s176, 0
      %s179 = sadd.s32 %s178, 1
      %s180 = scalar_select %p177, %s178, %s179
      %p183 = pneg %p177
      %p184 = scmp.eq.s32.totalorder %s21, 1
      %p185 = por %p183, %p184
      %p186 = scmp.ne.s32.totalorder %s178, %s181
      %p187 = scmp.eq.s32.totalorder %s21, 0
      %p188 = por %p186, %p187
      %p189 = scmp.ne.s32.totalorder %s178, %s181
      %p190 = scmp.eq.s32.totalorder %s26, 1
      %p191 = por %p189, %p190
      %p192 = scmp.ne.s32.totalorder %s181, %s182
      %p193 = scmp.eq.s32.totalorder %s26, 0
      %p194 = por %p192, %p193
      %p195 = scmp.ne.s32.totalorder %s181, %s182
      %p196 = scmp.eq.s32.totalorder %s27, 1
      %p197 = por %p195, %p196
      %p199 = scmp.ne.s32.totalorder %s182, %s198
      %p200 = scmp.eq.s32.totalorder %s27, 0
      %p201 = por %p199, %p200
      %p202 = scmp.le.s32.totalorder 1, %s21
      %p203 = scmp.lt.s32.totalorder %s21, 3
      %p204 = pnand %p202, %p203
      %p205 = pneg %p204
      // Predicated region
      $region9: #{tpu_custom_call.1} parent=5 // pred_check
        _
      $region10: #{tpu_custom_call.1} parent=5 // pred_check_branch
        %207 = sbr.rel (%p204) target = $region12
      $region11: #{tpu_custom_call.1} parent=5 // pred_region
        %s208 = ssub.s32 %s21, 1
        // Predicated region
        $region13: #{tpu_custom_call.1} parent=11 // pred_check
          %p209 = pneg %p82
        $region14: #{tpu_custom_call.1} parent=11 // pred_check_branch
          %211 = sbr.rel (%p209) target = $region16
        $region15: #{tpu_custom_call.1} parent=11 // pred_region
          %s213 = ssub.s32 512, 512
          %214 = vsyncadd [#allocation10], %s213
          %s215 = sshll.u32 [#allocation9], 4
          %s216 = int_to_ptr.vmem [resolvable:$true] %s215
          %221 = dma.hbm_to_vmem [thread:$0]  %s1, 512, %s216, [#allocation10], 128, 128, 8
        $region16: #{tpu_custom_call.1} parent=11 // pred_fallthru
          _
        // Predicated region
        $region17: #{tpu_custom_call.1} parent=11 // pred_check
          %p222 = pneg %p103
        $region18: #{tpu_custom_call.1} parent=11 // pred_check_branch
          %224 = sbr.rel (%p222) target = $region20
        $region19: #{tpu_custom_call.1} parent=11 // pred_region
          %s226 = ssub.s32 64, 64
          %227 = vsyncadd [#allocation10], %s226
          %s229 = sshll.u32 [#allocation11], 4
          %s230 = int_to_ptr.vmem [resolvable:$true] %s229
          %232 = dma.hbm_to_vmem [thread:$0]  %s2, 64, %s230, [#allocation10]
        $region20: #{tpu_custom_call.1} parent=11 // pred_fallthru
          _
        // Predicated region
        $region21: #{tpu_custom_call.1} parent=11 // pred_check
          %p233 = pneg %p124
        $region22: #{tpu_custom_call.1} parent=11 // pred_check_branch
          %235 = sbr.rel (%p233) target = $region24
        $region23: #{tpu_custom_call.1} parent=11 // pred_region
          %s237 = ssub.s32 16, 16
          %238 = vsyncadd [#allocation13], %s237
          %s240 = sshll.u32 [#allocation12], 4
          %s241 = int_to_ptr.vmem [resolvable:$true] %s240
          %243 = dma.hbm_to_vmem [thread:$0]  %s3, 16, %s241, [#allocation13]
        $region24: #{tpu_custom_call.1} parent=11 // pred_fallthru
          _
        // Predicated region
        $region25: #{tpu_custom_call.1} parent=11 // pred_check
          %p244 = pneg %p145
        $region26: #{tpu_custom_call.1} parent=11 // pred_check_branch
          %246 = sbr.rel (%p244) target = $region28
        $region27: #{tpu_custom_call.1} parent=11 // pred_region
          %s248 = ssub.s32 128, 128
          %249 = vsyncadd [#allocation13], %s248
          %s251 = sshll.u32 [#allocation14], 4
          %s252 = int_to_ptr.vmem [resolvable:$true] %s251
          %254 = dma.hbm_to_vmem [thread:$0]  %s4, 128, %s252, [#allocation13]
        $region28: #{tpu_custom_call.1} parent=11 // pred_fallthru
          _
        // Predicated region
        $region29: #{tpu_custom_call.1} parent=11 // pred_check
          %p255 = pneg %p166
        $region30: #{tpu_custom_call.1} parent=11 // pred_check_branch
          %257 = sbr.rel (%p255) target = $region32
        $region31: #{tpu_custom_call.1} parent=11 // pred_region
          %s259 = ssub.s32 16, 16
          %260 = vsyncadd [#allocation16], %s259
          %s262 = sshll.u32 [#allocation15], 4
          %s263 = int_to_ptr.vmem [resolvable:$true] %s262
          %265 = dma.hbm_to_vmem [thread:$0]  %s5, 16, %s263, [#allocation16]
        $region32: #{tpu_custom_call.1} parent=11 // pred_fallthru
          _
      $region12: #{tpu_custom_call.1} parent=5 // pred_fallthru
        _
      %p266 = scmp.lt.s32.totalorder %s21, 2
      // Predicated region
      $region33: #{tpu_custom_call.1} parent=5 // pred_check
        %p267 = pneg %p266
      $region34: #{tpu_custom_call.1} parent=5 // pred_check_branch
        %269 = sbr.rel (%p267) target = $region36
      $region35: #{tpu_custom_call.1} parent=5 // pred_region
        // Predicated region
        $region37: #{tpu_custom_call.1} parent=35 // pred_check
          %p270 = pneg %p55
        $region38: #{tpu_custom_call.1} parent=35 // pred_check_branch
          %272 = sbr.rel (%p270) target = $region40
        $region39: #{tpu_custom_call.1} parent=35 // pred_region
          %s273 = sand.u32 %s45, 1
          %s274 = scalar_lea.sflag [#allocation7], %s273
          %s275 = sand.u32 %s45, 1
          %s276 = smul.addr %s275, 8
          %s277 = scalar_lea.vmem [#allocation6], %s276
          %s279 = ssub.s32 128, 128
          %280 = vsyncadd %s274, %s279
          %s281 = sadd.s32 %s29, %s28
          %s282 = smul.addr %s281, 128
          %s283 = scalar_lea.hbm %s0, %s282
          %s285 = sshll.u32 %s277, 4
          %s286 = int_to_ptr.vmem [resolvable:$true] %s285
          %288 = dma.hbm_to_vmem [thread:$0]  %s283, 128, %s286, %s274
        $region40: #{tpu_custom_call.1} parent=35 // pred_fallthru
          _
      $region36: #{tpu_custom_call.1} parent=5 // pred_fallthru
        _
      %p289 = scmp.le.s32.totalorder 1, %s21
      %p290 = scmp.lt.s32.totalorder %s21, 3
      %p291 = pnand %p289, %p290
      %p292 = pneg %p291
      // Predicated region
      $region41: #{tpu_custom_call.1} parent=5 // pred_check
        _
      $region42: #{tpu_custom_call.1} parent=5 // pred_check_branch
        %294 = sbr.rel (%p291) target = $region44
      $region43: #{tpu_custom_call.1} parent=5 // pred_region
        %s295 = ssub.s32 %s21, 1
        %s296 = sand.u32 %s48, 1
        %s297 = scalar_lea.sflag [#allocation7], %s296
        %s298 = sand.u32 %s48, 1
        %s299 = smul.addr %s298, 8
        %s300 = scalar_lea.vmem [#allocation6], %s299
        // Predicated region
        $region45: #{tpu_custom_call.1} parent=43 // pred_check
          %p301 = pneg %p61
        $region46: #{tpu_custom_call.1} parent=43 // pred_check_branch
          %303 = sbr.rel (%p301) target = $region48
        $region47: #{tpu_custom_call.1} parent=43 // pred_region
          %304 = dma.done %s297, 128
        $region48: #{tpu_custom_call.1} parent=43 // pred_fallthru
          _
        // Predicated region
        $region49: #{tpu_custom_call.1} parent=43 // pred_check
          %p305 = pneg %p82
        $region50: #{tpu_custom_call.1} parent=43 // pred_check_branch
          %307 = sbr.rel (%p305) target = $region52
        $region51: #{tpu_custom_call.1} parent=43 // pred_region
          %308 = dma.done [#allocation10], 512
        $region52: #{tpu_custom_call.1} parent=43 // pred_fallthru
          _
        // Predicated region
        $region53: #{tpu_custom_call.1} parent=43 // pred_check
          %p309 = pneg %p103
        $region54: #{tpu_custom_call.1} parent=43 // pred_check_branch
          %311 = sbr.rel (%p309) target = $region56
        $region55: #{tpu_custom_call.1} parent=43 // pred_region
          %312 = dma.done [#allocation10], 64
        $region56: #{tpu_custom_call.1} parent=43 // pred_fallthru
          _
        // Predicated region
        $region57: #{tpu_custom_call.1} parent=43 // pred_check
          %p313 = pneg %p124
        $region58: #{tpu_custom_call.1} parent=43 // pred_check_branch
          %315 = sbr.rel (%p313) target = $region60
        $region59: #{tpu_custom_call.1} parent=43 // pred_region
          %316 = dma.done [#allocation13], 16
        $region60: #{tpu_custom_call.1} parent=43 // pred_fallthru
          _
        // Predicated region
        $region61: #{tpu_custom_call.1} parent=43 // pred_check
          %p317 = pneg %p145
        $region62: #{tpu_custom_call.1} parent=43 // pred_check_branch
          %319 = sbr.rel (%p317) target = $region64
        $region63: #{tpu_custom_call.1} parent=43 // pred_region
          %320 = dma.done [#allocation13], 128
        $region64: #{tpu_custom_call.1} parent=43 // pred_fallthru
          _
        // Predicated region
        $region65: #{tpu_custom_call.1} parent=43 // pred_check
          %p321 = pneg %p166
        $region66: #{tpu_custom_call.1} parent=43 // pred_check_branch
          %323 = sbr.rel (%p321) target = $region68
        $region67: #{tpu_custom_call.1} parent=43 // pred_region
          %324 = dma.done [#allocation16], 16
        $region68: #{tpu_custom_call.1} parent=43 // pred_fallthru
          _
        %s325 = sand.u32 %s48, 1
        %s326 = scalar_lea.sflag [#allocation7], %s325
        %s327 = sand.u32 %s48, 1
        %s328 = smul.addr %s327, 8
        %s329 = scalar_lea.vmem [#allocation6], %s328
        %p330 = pneg %p61
        %p331 = pneg %p58
        %p332 = pneg %p82
        %p333 = pneg %p79
        %p334 = pneg %p103
        %p335 = pneg %p100
        %p336 = pneg %p124
        %p337 = pneg %p121
        %p338 = pneg %p145
        %p339 = pneg %p142
        %p340 = pneg %p166
        %p341 = pneg %p163
        %p342 = pneg %p194
        %p343 = pneg %p191
        %s344 = sand.u32 %s181, 1
        %s345 = scalar_lea.sflag [#allocation8], %s344
        %s346 = sand.u32 %s181, 1
        %s347 = smul.addr %s346, 8
        %s348 = scalar_lea.vmem [#allocation17], %s347
        %p349 = scmp.eq.s32.totalorder %s31, 0
        // Predicated region
        $region69: #{tpu_custom_call.1} parent=43 // pred_check
          %p350 = pneg %p349
        $region70: #{tpu_custom_call.1} parent=43 // pred_check_branch
          %352 = sbr.rel (%p350) target = $region72
        $region71: #{tpu_custom_call.1} parent=43 // pred_region
          %vm353 = vcmask 261120
          %354 = vst.msk [vmem:[#allocation5] sm:$0xff] %vm353, 0.0
        $region72: #{tpu_custom_call.1} parent=43 // pred_fallthru
          _
        %v355 = vld [vmem:[%s300] sm:$0xff]
        %v356 = vld [vmem:[#allocation9] sm:$0xff]
        %v357 = vld [vmem:[#allocation9 + $0x8] sm:$0xff]
        %v358 = vld [vmem:[#allocation9 + $0x10] sm:$0xff]
        %v359 = vld [vmem:[#allocation9 + $0x18] sm:$0xff]
        %vm360 = vcmask 261120
        %v362 = vsel %vm360, %v355, 0
        %364 = vmatprep.subr.mxu0 0.0
        %365 = vmatpush1.msra.mxu0 %v356
        %366 = vmatprep.subr.mxu0 0.0
        %367 = vmatpush1.msra.mxu0 %v357
        %368 = vmatprep.subr.mxu0 0.0
        %369 = vmatpush1.msra.mxu0 %v358
        %370 = vmatprep.subr.mxu0 0.0
        %371 = vmatpush1.msra.mxu0 %v359
        %372 = vmatprep.subr.mxu0 0.0
        %373 = vmatpush1.msra.mxu0 0.0
        %374 = vmatprep.subr.mxu0 0.0
        %375 = vmatpush1.msra.mxu0 0.0
        %376 = vmatprep.subr.mxu0 0.0
        %377 = vmatpush1.msra.mxu0 0.0
        %378 = vmatprep.subr.mxu0 0.0
        %379 = vmatpush1.msra.mxu0 0.0
        %380 = vmatprep.subr.mxu0 0.0
        %381 = vmatpush1.msra.mxu0 0.0
        %382 = vmatprep.subr.mxu0 0.0
        %383 = vmatpush1.msra.mxu0 0.0
        %384 = vmatprep.subr.mxu0 0.0
        %385 = vmatpush1.msra.mxu0 0.0
        %386 = vmatprep.subr.mxu0 0.0
        %387 = vmatpush1.msra.mxu0 0.0
        %388 = vmatprep.subr.mxu0 0.0
        %389 = vmatpush1.msra.mxu0 0.0
        %390 = vmatprep.subr.mxu0 0.0
        %391 = vmatpush1.msra.mxu0 0.0
        %392 = vmatprep.subr.mxu0 0.0
        %393 = vmatpush1.msra.mxu0 0.0
        %394 = vmatprep.subr.mxu0 0.0
        %395 = vmatpush1.msra.mxu0 0.0
        %396 = vmatprep.subr.mxu0 0.0
        %397 = vmatpush1.msra.mxu0 0.0
        %398 = vmatprep.subr.mxu0 0.0
        %399 = vmatpush1.msra.mxu0 0.0
        %400 = vmatprep.subr.mxu0 0.0
        %401 = vmatpush1.msra.mxu0 0.0
        %402 = vmatprep.subr.mxu0 0.0
        %403 = vmatpush1.msra.mxu0 0.0
        %404 = vmatprep.subr.mxu0 0.0
        %405 = vmatpush1.msra.mxu0 0.0
        %406 = vmatprep.subr.mxu0 0.0
        %407 = vmatpush1.msra.mxu0 0.0
        %408 = vmatprep.subr.mxu0 0.0
        %409 = vmatpush1.msra.mxu0 0.0
        %410 = vmatprep.subr.mxu0 0.0
        %411 = vmatpush1.msra.mxu0 0.0
        %412 = vmatprep.subr.mxu0 0.0
        %413 = vmatpush1.msra.mxu0 0.0
        %414 = vmatprep.subr.mxu0 0.0
        %415 = vmatpush1.msra.mxu0 0.0
        %416 = vmatprep.subr.mxu0 0.0
        %417 = vmatpush1.msra.mxu0 0.0
        %418 = vmatprep.subr.mxu0 0.0
        %419 = vmatpush1.msra.mxu0 0.0
        %420 = vmatprep.subr.mxu0 0.0
        %421 = vmatpush1.msra.mxu0 0.0
        %422 = vmatprep.subr.mxu0 0.0
        %423 = vmatpush1.msra.mxu0 0.0
        %424 = vmatprep.subr.mxu0 0.0
        %425 = vmatpush1.msra.mxu0 0.0
        %426 = vmatprep.subr.mxu0 0.0
        %427 = vmatpush1.msra.mxu0 0.0
        %428 = vmatprep.mubr.f32.mxu0 0.0
        %429 = vmatmul.mubr.f32.gmra.mrb[0].mxu0 %v362
        %v430 = vpop.f32.mrb[0].mxu0
        %v431 = vadd.f32 0.0, %v430
        %v432 = vpop.f32.mrb[0].mxu0
        %433 = vdwg.mxu0
        %v434 = vld [vmem:[#allocation11] sm:$0xf]
        %v435 = vld [vmem:[#allocation12] sm:$0x1]
        %v437 = vlaneseq
        %v438 = vshrl.u32 %v437, 7
        %v439 = vsub.s32 0, %v438
        %v440 = vrot.slane %v435, %v439
        %vm442 = vcmask 31744
        %v444 = vsel %vm442, %v431, 0
        %vm446 = vcmask 1043456
        %v448 = vsel %vm446, %v434, 0
        %450 = vmatprep.subr.mxu0 0.0
        %451 = vmatpush1.msra.mxu0 %v448
        %452 = vmatprep.subr.mxu0 0.0
        %453 = vmatpush1.msra.mxu0 0.0
        %454 = vmatprep.subr.mxu0 0.0
        %455 = vmatpush1.msra.mxu0 0.0
        %456 = vmatprep.subr.mxu0 0.0
        %457 = vmatpush1.msra.mxu0 0.0
        %458 = vmatprep.subr.mxu0 0.0
        %459 = vmatpush1.msra.mxu0 0.0
        %460 = vmatprep.subr.mxu0 0.0
        %461 = vmatpush1.msra.mxu0 0.0
        %462 = vmatprep.subr.mxu0 0.0
        %463 = vmatpush1.msra.mxu0 0.0
        %464 = vmatprep.subr.mxu0 0.0
        %465 = vmatpush1.msra.mxu0 0.0
        %466 = vmatprep.subr.mxu0 0.0
        %467 = vmatpush1.msra.mxu0 0.0
        %468 = vmatprep.subr.mxu0 0.0
        %469 = vmatpush1.msra.mxu0 0.0
        %470 = vmatprep.subr.mxu0 0.0
        %471 = vmatpush1.msra.mxu0 0.0
        %472 = vmatprep.subr.mxu0 0.0
        %473 = vmatpush1.msra.mxu0 0.0
        %474 = vmatprep.subr.mxu0 0.0
        %475 = vmatpush1.msra.mxu0 0.0
        %476 = vmatprep.subr.mxu0 0.0
        %477 = vmatpush1.msra.mxu0 0.0
        %478 = vmatprep.subr.mxu0 0.0
        %479 = vmatpush1.msra.mxu0 0.0
        %480 = vmatprep.subr.mxu0 0.0
        %481 = vmatpush1.msra.mxu0 0.0
        %482 = vmatprep.subr.mxu0 0.0
        %483 = vmatpush1.msra.mxu0 0.0
        %484 = vmatprep.subr.mxu0 0.0
        %485 = vmatpush1.msra.mxu0 0.0
        %486 = vmatprep.subr.mxu0 0.0
        %487 = vmatpush1.msra.mxu0 0.0
        %488 = vmatprep.subr.mxu0 0.0
        %489 = vmatpush1.msra.mxu0 0.0
        %490 = vmatprep.subr.mxu0 0.0
        %491 = vmatpush1.msra.mxu0 0.0
        %492 = vmatprep.subr.mxu0 0.0
        %493 = vmatpush1.msra.mxu0 0.0
        %494 = vmatprep.subr.mxu0 0.0
        %495 = vmatpush1.msra.mxu0 0.0
        %496 = vmatprep.subr.mxu0 0.0
        %497 = vmatpush1.msra.mxu0 0.0
        %498 = vmatprep.subr.mxu0 0.0
        %499 = vmatpush1.msra.mxu0 0.0
        %500 = vmatprep.subr.mxu0 0.0
        %501 = vmatpush1.msra.mxu0 0.0
        %502 = vmatprep.subr.mxu0 0.0
        %503 = vmatpush1.msra.mxu0 0.0
        %504 = vmatprep.subr.mxu0 0.0
        %505 = vmatpush1.msra.mxu0 0.0
        %506 = vmatprep.subr.mxu0 0.0
        %507 = vmatpush1.msra.mxu0 0.0
        %508 = vmatprep.subr.mxu0 0.0
        %509 = vmatpush1.msra.mxu0 0.0
        %510 = vmatprep.subr.mxu0 0.0
        %511 = vmatpush1.msra.mxu0 0.0
        %512 = vmatprep.subr.mxu0 0.0
        %513 = vmatpush1.msra.mxu0 0.0
        %514 = vmatprep.mubr.f32.mxu0 0.0
        %515 = vmatmul.mubr.f32.gmra.mrb[0].mxu0 %v444
        %v516 = vpop.f32.mrb[0].mxu0
        %v517 = vadd.f32 %v440, %v516
        %v518 = vpop.f32.mrb[0].mxu0
        %519 = vdwg.mxu0
        %vm520 = vcmp.gt.f32.partialorder %v517, 20.0
        %v521 = vmul.f32 %v517, 1.442695
        %v522 = vpow.pop %v521
        %v523 = vadd.f32 %v522, 1.0
        %v524 = vlog2.pop %v523
        %v525 = vmul.f32 %v524, 0.6931472
        %v526 = vmul.f32 -0.5, %v522
        %v527 = vadd.f32 %v526, 1.0
        %v528 = vmul.f32 %v527, %v522
        %v529 = vand.u32 2147483647, %v522
        %vm530 = vcmp.lt.f32.partialorder %v529, 0.0004427343
        %v531 = vsel %vm530, %v528, %v525
        %v532 = vsel %vm520, %v517, %v531
        %533 = vrot.lane.b32.xlu0 %v431, 116
        %v534 = vpop.permute.xlu0 %533
        %vm536 = vcmask 64512
        %537 = vst.msk [vmem:[#allocation4] sm:$0xff] %vm536, %v534
        %v538 = vld [vmem:[#allocation14] sm:$0xff]
        %v540 = vcombine.high %v532, %v532
        %v542 = vunpack.c.l.s4 1966171168
        %v543 = vunpack.c.0.s8 %v542
        %v544 = vlaneseq
        %v545 = vshrl.u32 %v544, 7
        %v546 = vsub.s32 %v543, %v545
        %v547 = vrot.slane %v532, %v546
        %v549 = vunpack.c.l.s4 1966171168
        %v550 = vunpack.c.0.s8 %v549
        %v551 = vlaneseq
        %v552 = vshrl.u32 %v551, 7
        %v553 = vsub.s32 %v550, %v552
        %v554 = vrot.slane %v540, %v553
        %v555 = vcombine.high %v547, %v547
        %v556 = vcombine.high %v554, %v554
        %v558 = vunpack.c.l.s4 1966171168
        %v559 = vunpack.c.0.s8 %v558
        %v560 = vlaneseq
        %v561 = vshrl.u32 %v560, 7
        %v562 = vsub.s32 %v559, %v561
        %v563 = vrot.slane %v547, %v562
        %v565 = vunpack.c.l.s4 1966171168
        %v566 = vunpack.c.0.s8 %v565
        %v567 = vlaneseq
        %v568 = vshrl.u32 %v567, 7
        %v569 = vsub.s32 %v566, %v568
        %v570 = vrot.slane %v554, %v569
        %v572 = vunpack.c.l.s4 1966171168
        %v573 = vunpack.c.0.s8 %v572
        %v574 = vlaneseq
        %v575 = vshrl.u32 %v574, 7
        %v576 = vsub.s32 %v573, %v575
        %v577 = vrot.slane %v555, %v576
        %v579 = vunpack.c.l.s4 1966171168
        %v580 = vunpack.c.0.s8 %v579
        %v581 = vlaneseq
        %v582 = vshrl.u32 %v581, 7
        %v583 = vsub.s32 %v580, %v582
        %v584 = vrot.slane %v556, %v583
        %v585 = vcombine.high %v563, %v563
        %v586 = vcombine.high %v570, %v570
        %v587 = vcombine.high %v577, %v577
        %v588 = vcombine.high %v584, %v584
        %v589 = vlaneseq
        %v590 = vshrl.u32 %v589, 7
        %v591 = vsub.s32 0, %v590
        %v592 = vrot.slane %v563, %v591
        %v593 = vlaneseq
        %v594 = vshrl.u32 %v593, 7
        %v595 = vsub.s32 0, %v594
        %v596 = vrot.slane %v577, %v595
        %v597 = vlaneseq
        %v598 = vshrl.u32 %v597, 7
        %v599 = vsub.s32 0, %v598
        %v600 = vrot.slane %v585, %v599
        %v601 = vlaneseq
        %v602 = vshrl.u32 %v601, 7
        %v603 = vsub.s32 0, %v602
        %v604 = vrot.slane %v587, %v603
        %v605 = vlaneseq
        %v606 = vshrl.u32 %v605, 7
        %v607 = vsub.s32 0, %v606
        %v608 = vrot.slane %v570, %v607
        %v609 = vlaneseq
        %v610 = vshrl.u32 %v609, 7
        %v611 = vsub.s32 0, %v610
        %v612 = vrot.slane %v584, %v611
        %v613 = vlaneseq
        %v614 = vshrl.u32 %v613, 7
        %v615 = vsub.s32 0, %v614
        %v616 = vrot.slane %v586, %v615
        %v617 = vlaneseq
        %v618 = vshrl.u32 %v617, 7
        %v619 = vsub.s32 0, %v618
        %v620 = vrot.slane %v588, %v619
        %v629 = vmul.f32 %v592, %v538
        %v630 = vmul.f32 %v596, %v538
        %v631 = vmul.f32 %v600, %v538
        %v632 = vmul.f32 %v604, %v538
        %v633 = vmul.f32 %v608, %v538
        %v634 = vmul.f32 %v612, %v538
        %v635 = vmul.f32 %v616, %v538
        %v636 = vmul.f32 %v620, %v538
        %v637 = vmul.f32 %v629, 1.442695
        %v638 = vpow.pop %v637
        %v639 = vmul.f32 %v630, 1.442695
        %v640 = vpow.pop %v639
        %v641 = vmul.f32 %v631, 1.442695
        %v642 = vpow.pop %v641
        %v643 = vmul.f32 %v632, 1.442695
        %v644 = vpow.pop %v643
        %v645 = vmul.f32 %v633, 1.442695
        %v646 = vpow.pop %v645
        %v647 = vmul.f32 %v634, 1.442695
        %v648 = vpow.pop %v647
        %v649 = vmul.f32 %v635, 1.442695
        %v650 = vpow.pop %v649
        %v651 = vmul.f32 %v636, 1.442695
        %v652 = vpow.pop %v651
        %653 = vst.msk [vmem:[#allocation2] sm:$0xff] %vm360, %v638
        %654 = vst.msk [vmem:[#allocation2 + $0x8] sm:$0xff] %vm360, %v640
        %655 = vst.msk [vmem:[#allocation2 + $0x10] sm:$0xff] %vm360, %v642
        %656 = vst.msk [vmem:[#allocation2 + $0x18] sm:$0xff] %vm360, %v644
        %657 = vst.msk [vmem:[#allocation2 + $0x20] sm:$0xff] %vm360, %v646
        %658 = vst.msk [vmem:[#allocation2 + $0x28] sm:$0xff] %vm360, %v648
        %659 = vst.msk [vmem:[#allocation2 + $0x30] sm:$0xff] %vm360, %v650
        %660 = vst.msk [vmem:[#allocation2 + $0x38] sm:$0xff] %vm360, %v652
        %v661 = vmul.f32 %v532, %v355
        %v663 = vcombine.high %v661, %v661
        %v665 = vunpack.c.l.s4 1966171168
        %v666 = vunpack.c.0.s8 %v665
        %v667 = vlaneseq
        %v668 = vshrl.u32 %v667, 7
        %v669 = vsub.s32 %v666, %v668
        %v670 = vrot.slane %v661, %v669
        %v672 = vunpack.c.l.s4 1966171168
        %v673 = vunpack.c.0.s8 %v672
        %v674 = vlaneseq
        %v675 = vshrl.u32 %v674, 7
        %v676 = vsub.s32 %v673, %v675
        %v677 = vrot.slane %v663, %v676
        %v678 = vcombine.high %v670, %v670
        %v679 = vcombine.high %v677, %v677
        %v681 = vunpack.c.l.s4 1966171168
        %v682 = vunpack.c.0.s8 %v681
        %v683 = vlaneseq
        %v684 = vshrl.u32 %v683, 7
        %v685 = vsub.s32 %v682, %v684
        %v686 = vrot.slane %v670, %v685
        %v688 = vunpack.c.l.s4 1966171168
        %v689 = vunpack.c.0.s8 %v688
        %v690 = vlaneseq
        %v691 = vshrl.u32 %v690, 7
        %v692 = vsub.s32 %v689, %v691
        %v693 = vrot.slane %v677, %v692
        %v695 = vunpack.c.l.s4 1966171168
        %v696 = vunpack.c.0.s8 %v695
        %v697 = vlaneseq
        %v698 = vshrl.u32 %v697, 7
        %v699 = vsub.s32 %v696, %v698
        %v700 = vrot.slane %v678, %v699
        %v702 = vunpack.c.l.s4 1966171168
        %v703 = vunpack.c.0.s8 %v702
        %v704 = vlaneseq
        %v705 = vshrl.u32 %v704, 7
        %v706 = vsub.s32 %v703, %v705
        %v707 = vrot.slane %v679, %v706
        %v708 = vcombine.high %v686, %v686
        %v709 = vcombine.high %v693, %v693
        %v710 = vcombine.high %v700, %v700
        %v711 = vcombine.high %v707, %v707
        %v712 = vlaneseq
        %v713 = vshrl.u32 %v712, 7
        %v714 = vsub.s32 0, %v713
        %v715 = vrot.slane %v431, %v714
        %s717 = sor.u32 256, 4
        %718 = vbcast.lane.b32.xlu0 %v715, %s717
        %v719 = vpop.permute.xlu0 %718
        %v720 = vlaneseq
        %v721 = vshrl.u32 %v720, 7
        %v722 = vsub.s32 1, %v721
        %v723 = vrot.slane %v431, %v722
        %s725 = sor.u32 256, 4
        %726 = vbcast.lane.b32.xlu0 %v723, %s725
        %v727 = vpop.permute.xlu0 %726
        %v728 = vlaneseq
        %v729 = vshrl.u32 %v728, 7
        %v730 = vsub.s32 2, %v729
        %v731 = vrot.slane %v431, %v730
        %s733 = sor.u32 256, 4
        %734 = vbcast.lane.b32.xlu0 %v731, %s733
        %v735 = vpop.permute.xlu0 %734
        %v736 = vlaneseq
        %v737 = vshrl.u32 %v736, 7
        %v738 = vsub.s32 3, %v737
        %v739 = vrot.slane %v431, %v738
        %s741 = sor.u32 256, 4
        %742 = vbcast.lane.b32.xlu0 %v739, %s741
        %v743 = vpop.permute.xlu0 %742
        %v744 = vlaneseq
        %v745 = vshrl.u32 %v744, 7
        %v746 = vsub.s32 4, %v745
        %v747 = vrot.slane %v431, %v746
        %s749 = sor.u32 256, 4
        %750 = vbcast.lane.b32.xlu0 %v747, %s749
        %v751 = vpop.permute.xlu0 %750
        %v752 = vlaneseq
        %v753 = vshrl.u32 %v752, 7
        %v754 = vsub.s32 5, %v753
        %v755 = vrot.slane %v431, %v754
        %s757 = sor.u32 256, 4
        %758 = vbcast.lane.b32.xlu0 %v755, %s757
        %v759 = vpop.permute.xlu0 %758
        %v760 = vlaneseq
        %v761 = vshrl.u32 %v760, 7
        %v762 = vsub.s32 6, %v761
        %v763 = vrot.slane %v431, %v762
        %s765 = sor.u32 256, 4
        %766 = vbcast.lane.b32.xlu0 %v763, %s765
        %v767 = vpop.permute.xlu0 %766
        %v768 = vlaneseq
        %v769 = vshrl.u32 %v768, 7
        %v770 = vsub.s32 7, %v769
        %v771 = vrot.slane %v431, %v770
        %s773 = sor.u32 256, 4
        %774 = vbcast.lane.b32.xlu0 %v771, %s773
        %v775 = vpop.permute.xlu0 %774
        %v776 = vlaneseq
        %v777 = vshrl.u32 %v776, 7
        %v778 = vsub.s32 0, %v777
        %v779 = vrot.slane %v686, %v778
        %v780 = vlaneseq
        %v781 = vshrl.u32 %v780, 7
        %v782 = vsub.s32 0, %v781
        %v783 = vrot.slane %v700, %v782
        %v784 = vlaneseq
        %v785 = vshrl.u32 %v784, 7
        %v786 = vsub.s32 0, %v785
        %v787 = vrot.slane %v708, %v786
        %v788 = vlaneseq
        %v789 = vshrl.u32 %v788, 7
        %v790 = vsub.s32 0, %v789
        %v791 = vrot.slane %v710, %v790
        %v792 = vlaneseq
        %v793 = vshrl.u32 %v792, 7
        %v794 = vsub.s32 0, %v793
        %v795 = vrot.slane %v693, %v794
        %v796 = vlaneseq
        %v797 = vshrl.u32 %v796, 7
        %v798 = vsub.s32 0, %v797
        %v799 = vrot.slane %v707, %v798
        %v800 = vlaneseq
        %v801 = vshrl.u32 %v800, 7
        %v802 = vsub.s32 0, %v801
        %v803 = vrot.slane %v709, %v802
        %v804 = vlaneseq
        %v805 = vshrl.u32 %v804, 7
        %v806 = vsub.s32 0, %v805
        %v807 = vrot.slane %v711, %v806
        %v816 = vmul.f32 %v779, %v719
        %v817 = vmul.f32 %v783, %v727
        %v818 = vmul.f32 %v787, %v735
        %v819 = vmul.f32 %v791, %v743
        %v820 = vmul.f32 %v795, %v751
        %v821 = vmul.f32 %v799, %v759
        %v822 = vmul.f32 %v803, %v767
        %v823 = vmul.f32 %v807, %v775
        %824 = vst.msk [vmem:[#allocation3] sm:$0xff] %vm360, %v816
        %825 = vst.msk [vmem:[#allocation3 + $0x8] sm:$0xff] %vm360, %v817
        %826 = vst.msk [vmem:[#allocation3 + $0x10] sm:$0xff] %vm360, %v818
        %827 = vst.msk [vmem:[#allocation3 + $0x18] sm:$0xff] %vm360, %v819
        %828 = vst.msk [vmem:[#allocation3 + $0x20] sm:$0xff] %vm360, %v820
        %829 = vst.msk [vmem:[#allocation3 + $0x28] sm:$0xff] %vm360, %v821
        %830 = vst.msk [vmem:[#allocation3 + $0x30] sm:$0xff] %vm360, %v822
        %831 = vst.msk [vmem:[#allocation3 + $0x38] sm:$0xff] %vm360, %v823
        %v832 = vld [vmem:[#allocation5] sm:$0xff]
        %v833 = vld [vmem:[#allocation2] sm:$0xff]
        %v834 = vld [vmem:[#allocation3] sm:$0xff]
        %v835 = vmul.f32 %v833, %v832
        %v836 = vadd.f32 %v835, %v834
        %v837 = vld [vmem:[#allocation4] sm:$0x1]
        %v839 = vsel %vm536, %v837, 0
        %841 = vmatprep.subr.mxu0 0.0
        %842 = vmatpush1.msra.mxu0 %v836
        %843 = vmatprep.subr.mxu0 0.0
        %844 = vmatpush1.msra.mxu0 0.0
        %845 = vmatprep.subr.mxu0 0.0
        %846 = vmatpush1.msra.mxu0 0.0
        %847 = vmatprep.subr.mxu0 0.0
        %848 = vmatpush1.msra.mxu0 0.0
        %849 = vmatprep.subr.mxu0 0.0
        %850 = vmatpush1.msra.mxu0 0.0
        %851 = vmatprep.subr.mxu0 0.0
        %852 = vmatpush1.msra.mxu0 0.0
        %853 = vmatprep.subr.mxu0 0.0
        %854 = vmatpush1.msra.mxu0 0.0
        %855 = vmatprep.subr.mxu0 0.0
        %856 = vmatpush1.msra.mxu0 0.0
        %857 = vmatprep.subr.mxu0 0.0
        %858 = vmatpush1.msra.mxu0 0.0
        %859 = vmatprep.subr.mxu0 0.0
        %860 = vmatpush1.msra.mxu0 0.0
        %861 = vmatprep.subr.mxu0 0.0
        %862 = vmatpush1.msra.mxu0 0.0
        %863 = vmatprep.subr.mxu0 0.0
        %864 = vmatpush1.msra.mxu0 0.0
        %865 = vmatprep.subr.mxu0 0.0
        %866 = vmatpush1.msra.mxu0 0.0
        %867 = vmatprep.subr.mxu0 0.0
        %868 = vmatpush1.msra.mxu0 0.0
        %869 = vmatprep.subr.mxu0 0.0
        %870 = vmatpush1.msra.mxu0 0.0
        %871 = vmatprep.subr.mxu0 0.0
        %872 = vmatpush1.msra.mxu0 0.0
        %873 = vmatprep.subr.mxu0 0.0
        %874 = vmatpush1.msra.mxu0 0.0
        %875 = vmatprep.subr.mxu0 0.0
        %876 = vmatpush1.msra.mxu0 0.0
        %877 = vmatprep.subr.mxu0 0.0
        %878 = vmatpush1.msra.mxu0 0.0
        %879 = vmatprep.subr.mxu0 0.0
        %880 = vmatpush1.msra.mxu0 0.0
        %881 = vmatprep.subr.mxu0 0.0
        %882 = vmatpush1.msra.mxu0 0.0
        %883 = vmatprep.subr.mxu0 0.0
        %884 = vmatpush1.msra.mxu0 0.0
        %885 = vmatprep.subr.mxu0 0.0
        %886 = vmatpush1.msra.mxu0 0.0
        %887 = vmatprep.subr.mxu0 0.0
        %888 = vmatpush1.msra.mxu0 0.0
        %889 = vmatprep.subr.mxu0 0.0
        %890 = vmatpush1.msra.mxu0 0.0
        %891 = vmatprep.subr.mxu0 0.0
        %892 = vmatpush1.msra.mxu0 0.0
        %893 = vmatprep.subr.mxu0 0.0
        %894 = vmatpush1.msra.mxu0 0.0
        %895 = vmatprep.subr.mxu0 0.0
        %896 = vmatpush1.msra.mxu0 0.0
        %897 = vmatprep.subr.mxu0 0.0
        %898 = vmatpush1.msra.mxu0 0.0
        %899 = vmatprep.subr.mxu0 0.0
        %900 = vmatpush1.msra.mxu0 0.0
        %901 = vmatprep.subr.mxu0 0.0
        %902 = vmatpush1.msra.mxu0 0.0
        %903 = vmatprep.subr.mxu0 0.0
        %904 = vmatpush1.msra.mxu0 0.0
        %905 = vmatprep.mubr.f32.mxu0 0.0
        %906 = vmatmul.mubr.f32.gmra.mrb[0].mxu0 %v839
        %v907 = vpop.f32.mrb[0].mxu0
        %v908 = vadd.f32 0.0, %v907
        %v909 = vpop.f32.mrb[0].mxu0
        %910 = vdwg.mxu0
        %vm911 = vcmask 253952
        %912 = vst.msk [vmem:[%s348] sm:$0x1] %vm911, %v908
        %s913 = scalar_lea.vmem [#allocation2], 8
        %v914 = vld [vmem:[%s913] sm:$0xff]
        %s915 = scalar_lea.vmem [#allocation3], 8
        %v916 = vld [vmem:[%s915] sm:$0xff]
        %v917 = vmul.f32 %v914, %v836
        %v918 = vadd.f32 %v917, %v916
        %v919 = vld [vmem:[#allocation4 + $0x1] sm:$0x1]
        %v921 = vsel %vm536, %v919, 0
        %923 = vmatprep.subr.mxu0 0.0
        %924 = vmatpush1.msra.mxu0 %v918
        %925 = vmatprep.subr.mxu0 0.0
        %926 = vmatpush1.msra.mxu0 0.0
        %927 = vmatprep.subr.mxu0 0.0
        %928 = vmatpush1.msra.mxu0 0.0
        %929 = vmatprep.subr.mxu0 0.0
        %930 = vmatpush1.msra.mxu0 0.0
        %931 = vmatprep.subr.mxu0 0.0
        %932 = vmatpush1.msra.mxu0 0.0
        %933 = vmatprep.subr.mxu0 0.0
        %934 = vmatpush1.msra.mxu0 0.0
        %935 = vmatprep.subr.mxu0 0.0
        %936 = vmatpush1.msra.mxu0 0.0
        %937 = vmatprep.subr.mxu0 0.0
        %938 = vmatpush1.msra.mxu0 0.0
        %939 = vmatprep.subr.mxu0 0.0
        %940 = vmatpush1.msra.mxu0 0.0
        %941 = vmatprep.subr.mxu0 0.0
        %942 = vmatpush1.msra.mxu0 0.0
        %943 = vmatprep.subr.mxu0 0.0
        %944 = vmatpush1.msra.mxu0 0.0
        %945 = vmatprep.subr.mxu0 0.0
        %946 = vmatpush1.msra.mxu0 0.0
        %947 = vmatprep.subr.mxu0 0.0
        %948 = vmatpush1.msra.mxu0 0.0
        %949 = vmatprep.subr.mxu0 0.0
        %950 = vmatpush1.msra.mxu0 0.0
        %951 = vmatprep.subr.mxu0 0.0
        %952 = vmatpush1.msra.mxu0 0.0
        %953 = vmatprep.subr.mxu0 0.0
        %954 = vmatpush1.msra.mxu0 0.0
        %955 = vmatprep.subr.mxu0 0.0
        %956 = vmatpush1.msra.mxu0 0.0
        %957 = vmatprep.subr.mxu0 0.0
        %958 = vmatpush1.msra.mxu0 0.0
        %959 = vmatprep.subr.mxu0 0.0
        %960 = vmatpush1.msra.mxu0 0.0
        %961 = vmatprep.subr.mxu0 0.0
        %962 = vmatpush1.msra.mxu0 0.0
        %963 = vmatprep.subr.mxu0 0.0
        %964 = vmatpush1.msra.mxu0 0.0
        %965 = vmatprep.subr.mxu0 0.0
        %966 = vmatpush1.msra.mxu0 0.0
        %967 = vmatprep.subr.mxu0 0.0
        %968 = vmatpush1.msra.mxu0 0.0
        %969 = vmatprep.subr.mxu0 0.0
        %970 = vmatpush1.msra.mxu0 0.0
        %971 = vmatprep.subr.mxu0 0.0
        %972 = vmatpush1.msra.mxu0 0.0
        %973 = vmatprep.subr.mxu0 0.0
        %974 = vmatpush1.msra.mxu0 0.0
        %975 = vmatprep.subr.mxu0 0.0
        %976 = vmatpush1.msra.mxu0 0.0
        %977 = vmatprep.subr.mxu0 0.0
        %978 = vmatpush1.msra.mxu0 0.0
        %979 = vmatprep.subr.mxu0 0.0
        %980 = vmatpush1.msra.mxu0 0.0
        %981 = vmatprep.subr.mxu0 0.0
        %982 = vmatpush1.msra.mxu0 0.0
        %983 = vmatprep.subr.mxu0 0.0
        %984 = vmatpush1.msra.mxu0 0.0
        %985 = vmatprep.subr.mxu0 0.0
        %986 = vmatpush1.msra.mxu0 0.0
        %987 = vmatprep.mubr.f32.mxu0 0.0
        %988 = vmatmul.mubr.f32.gmra.mrb[0].mxu0 %v921
        %v989 = vpop.f32.mrb[0].mxu0
        %v990 = vadd.f32 0.0, %v989
        %v991 = vpop.f32.mrb[0].mxu0
        %992 = vdwg.mxu0
        %993 = vst.msk [vmem:[%s348 + $0x1] sm:$0x1] %vm911, %v990
        %s994 = scalar_lea.vmem [#allocation2], 16
        %v995 = vld [vmem:[%s994] sm:$0xff]
        %s996 = scalar_lea.vmem [#allocation3], 16
        %v997 = vld [vmem:[%s996] sm:$0xff]
        %v998 = vmul.f32 %v995, %v918
        %v999 = vadd.f32 %v998, %v997
        %v1000 = vld [vmem:[#allocation4 + $0x2] sm:$0x1]
        %v1002 = vsel %vm536, %v1000, 0
        %1004 = vmatprep.subr.mxu0 0.0
        %1005 = vmatpush1.msra.mxu0 %v999
        %1006 = vmatprep.subr.mxu0 0.0
        %1007 = vmatpush1.msra.mxu0 0.0
        %1008 = vmatprep.subr.mxu0 0.0
        %1009 = vmatpush1.msra.mxu0 0.0
        %1010 = vmatprep.subr.mxu0 0.0
        %1011 = vmatpush1.msra.mxu0 0.0
        %1012 = vmatprep.subr.mxu0 0.0
        %1013 = vmatpush1.msra.mxu0 0.0
        %1014 = vmatprep.subr.mxu0 0.0
        %1015 = vmatpush1.msra.mxu0 0.0
        %1016 = vmatprep.subr.mxu0 0.0
        %1017 = vmatpush1.msra.mxu0 0.0
        %1018 = vmatprep.subr.mxu0 0.0
        %1019 = vmatpush1.msra.mxu0 0.0
        %1020 = vmatprep.subr.mxu0 0.0
        %1021 = vmatpush1.msra.mxu0 0.0
        %1022 = vmatprep.subr.mxu0 0.0
        %1023 = vmatpush1.msra.mxu0 0.0
        %1024 = vmatprep.subr.mxu0 0.0
        %1025 = vmatpush1.msra.mxu0 0.0
        %1026 = vmatprep.subr.mxu0 0.0
        %1027 = vmatpush1.msra.mxu0 0.0
        %1028 = vmatprep.subr.mxu0 0.0
        %1029 = vmatpush1.msra.mxu0 0.0
        %1030 = vmatprep.subr.mxu0 0.0
        %1031 = vmatpush1.msra.mxu0 0.0
        %1032 = vmatprep.subr.mxu0 0.0
        %1033 = vmatpush1.msra.mxu0 0.0
        %1034 = vmatprep.subr.mxu0 0.0
        %1035 = vmatpush1.msra.mxu0 0.0
        %1036 = vmatprep.subr.mxu0 0.0
        %1037 = vmatpush1.msra.mxu0 0.0
        %1038 = vmatprep.subr.mxu0 0.0
        %1039 = vmatpush1.msra.mxu0 0.0
        %1040 = vmatprep.subr.mxu0 0.0
        %1041 = vmatpush1.msra.mxu0 0.0
        %1042 = vmatprep.subr.mxu0 0.0
        %1043 = vmatpush1.msra.mxu0 0.0
        %1044 = vmatprep.subr.mxu0 0.0
        %1045 = vmatpush1.msra.mxu0 0.0
        %1046 = vmatprep.subr.mxu0 0.0
        %1047 = vmatpush1.msra.mxu0 0.0
        %1048 = vmatprep.subr.mxu0 0.0
        %1049 = vmatpush1.msra.mxu0 0.0
        %1050 = vmatprep.subr.mxu0 0.0
        %1051 = vmatpush1.msra.mxu0 0.0
        %1052 = vmatprep.subr.mxu0 0.0
        %1053 = vmatpush1.msra.mxu0 0.0
        %1054 = vmatprep.subr.mxu0 0.0
        %1055 = vmatpush1.msra.mxu0 0.0
        %1056 = vmatprep.subr.mxu0 0.0
        %1057 = vmatpush1.msra.mxu0 0.0
        %1058 = vmatprep.subr.mxu0 0.0
        %1059 = vmatpush1.msra.mxu0 0.0
        %1060 = vmatprep.subr.mxu0 0.0
        %1061 = vmatpush1.msra.mxu0 0.0
        %1062 = vmatprep.subr.mxu0 0.0
        %1063 = vmatpush1.msra.mxu0 0.0
        %1064 = vmatprep.subr.mxu0 0.0
        %1065 = vmatpush1.msra.mxu0 0.0
        %1066 = vmatprep.subr.mxu0 0.0
        %1067 = vmatpush1.msra.mxu0 0.0
        %1068 = vmatprep.mubr.f32.mxu0 0.0
        %1069 = vmatmul.mubr.f32.gmra.mrb[0].mxu0 %v1002
        %v1070 = vpop.f32.mrb[0].mxu0
        %v1071 = vadd.f32 0.0, %v1070
        %v1072 = vpop.f32.mrb[0].mxu0
        %1073 = vdwg.mxu0
        %1074 = vst.msk [vmem:[%s348 + $0x2] sm:$0x1] %vm911, %v1071
        %s1075 = scalar_lea.vmem [#allocation2], 24
        %v1076 = vld [vmem:[%s1075] sm:$0xff]
        %s1077 = scalar_lea.vmem [#allocation3], 24
        %v1078 = vld [vmem:[%s1077] sm:$0xff]
        %v1079 = vmul.f32 %v1076, %v999
        %v1080 = vadd.f32 %v1079, %v1078
        %v1081 = vld [vmem:[#allocation4 + $0x3] sm:$0x1]
        %v1083 = vsel %vm536, %v1081, 0
        %1085 = vmatprep.subr.mxu0 0.0
        %1086 = vmatpush1.msra.mxu0 %v1080
        %1087 = vmatprep.subr.mxu0 0.0
        %1088 = vmatpush1.msra.mxu0 0.0
        %1089 = vmatprep.subr.mxu0 0.0
        %1090 = vmatpush1.msra.mxu0 0.0
        %1091 = vmatprep.subr.mxu0 0.0
        %1092 = vmatpush1.msra.mxu0 0.0
        %1093 = vmatprep.subr.mxu0 0.0
        %1094 = vmatpush1.msra.mxu0 0.0
        %1095 = vmatprep.subr.mxu0 0.0
        %1096 = vmatpush1.msra.mxu0 0.0
        %1097 = vmatprep.subr.mxu0 0.0
        %1098 = vmatpush1.msra.mxu0 0.0
        %1099 = vmatprep.subr.mxu0 0.0
        %1100 = vmatpush1.msra.mxu0 0.0
        %1101 = vmatprep.subr.mxu0 0.0
        %1102 = vmatpush1.msra.mxu0 0.0
        %1103 = vmatprep.subr.mxu0 0.0
        %1104 = vmatpush1.msra.mxu0 0.0
        %1105 = vmatprep.subr.mxu0 0.0
        %1106 = vmatpush1.msra.mxu0 0.0
        %1107 = vmatprep.subr.mxu0 0.0
        %1108 = vmatpush1.msra.mxu0 0.0
        %1109 = vmatprep.subr.mxu0 0.0
        %1110 = vmatpush1.msra.mxu0 0.0
        %1111 = vmatprep.subr.mxu0 0.0
        %1112 = vmatpush1.msra.mxu0 0.0
        %1113 = vmatprep.subr.mxu0 0.0
        %1114 = vmatpush1.msra.mxu0 0.0
        %1115 = vmatprep.subr.mxu0 0.0
        %1116 = vmatpush1.msra.mxu0 0.0
        %1117 = vmatprep.subr.mxu0 0.0
        %1118 = vmatpush1.msra.mxu0 0.0
        %1119 = vmatprep.subr.mxu0 0.0
        %1120 = vmatpush1.msra.mxu0 0.0
        %1121 = vmatprep.subr.mxu0 0.0
        %1122 = vmatpush1.msra.mxu0 0.0
        %1123 = vmatprep.subr.mxu0 0.0
        %1124 = vmatpush1.msra.mxu0 0.0
        %1125 = vmatprep.subr.mxu0 0.0
        %1126 = vmatpush1.msra.mxu0 0.0
        %1127 = vmatprep.subr.mxu0 0.0
        %1128 = vmatpush1.msra.mxu0 0.0
        %1129 = vmatprep.subr.mxu0 0.0
        %1130 = vmatpush1.msra.mxu0 0.0
        %1131 = vmatprep.subr.mxu0 0.0
        %1132 = vmatpush1.msra.mxu0 0.0
        %1133 = vmatprep.subr.mxu0 0.0
        %1134 = vmatpush1.msra.mxu0 0.0
        %1135 = vmatprep.subr.mxu0 0.0
        %1136 = vmatpush1.msra.mxu0 0.0
        %1137 = vmatprep.subr.mxu0 0.0
        %1138 = vmatpush1.msra.mxu0 0.0
        %1139 = vmatprep.subr.mxu0 0.0
        %1140 = vmatpush1.msra.mxu0 0.0
        %1141 = vmatprep.subr.mxu0 0.0
        %1142 = vmatpush1.msra.mxu0 0.0
        %1143 = vmatprep.subr.mxu0 0.0
        %1144 = vmatpush1.msra.mxu0 0.0
        %1145 = vmatprep.subr.mxu0 0.0
        %1146 = vmatpush1.msra.mxu0 0.0
        %1147 = vmatprep.subr.mxu0 0.0
        %1148 = vmatpush1.msra.mxu0 0.0
        %1149 = vmatprep.mubr.f32.mxu0 0.0
        %1150 = vmatmul.mubr.f32.gmra.mrb[0].mxu0 %v1083
        %v1151 = vpop.f32.mrb[0].mxu0
        %v1152 = vadd.f32 0.0, %v1151
        %v1153 = vpop.f32.mrb[0].mxu0
        %1154 = vdwg.mxu0
        %1155 = vst.msk [vmem:[%s348 + $0x3] sm:$0x1] %vm911, %v1152
        %s1156 = scalar_lea.vmem [#allocation2], 32
        %v1157 = vld [vmem:[%s1156] sm:$0xff]
        %s1158 = scalar_lea.vmem [#allocation3], 32
        %v1159 = vld [vmem:[%s1158] sm:$0xff]
        %v1160 = vmul.f32 %v1157, %v1080
        %v1161 = vadd.f32 %v1160, %v1159
        %v1162 = vld [vmem:[#allocation4 + $0x4] sm:$0x1]
        %v1164 = vsel %vm536, %v1162, 0
        %1166 = vmatprep.subr.mxu0 0.0
        %1167 = vmatpush1.msra.mxu0 %v1161
        %1168 = vmatprep.subr.mxu0 0.0
        %1169 = vmatpush1.msra.mxu0 0.0
        %1170 = vmatprep.subr.mxu0 0.0
        %1171 = vmatpush1.msra.mxu0 0.0
        %1172 = vmatprep.subr.mxu0 0.0
        %1173 = vmatpush1.msra.mxu0 0.0
        %1174 = vmatprep.subr.mxu0 0.0
        %1175 = vmatpush1.msra.mxu0 0.0
        %1176 = vmatprep.subr.mxu0 0.0
        %1177 = vmatpush1.msra.mxu0 0.0
        %1178 = vmatprep.subr.mxu0 0.0
        %1179 = vmatpush1.msra.mxu0 0.0
        %1180 = vmatprep.subr.mxu0 0.0
        %1181 = vmatpush1.msra.mxu0 0.0
        %1182 = vmatprep.subr.mxu0 0.0
        %1183 = vmatpush1.msra.mxu0 0.0
        %1184 = vmatprep.subr.mxu0 0.0
        %1185 = vmatpush1.msra.mxu0 0.0
        %1186 = vmatprep.subr.mxu0 0.0
        %1187 = vmatpush1.msra.mxu0 0.0
        %1188 = vmatprep.subr.mxu0 0.0
        %1189 = vmatpush1.msra.mxu0 0.0
        %1190 = vmatprep.subr.mxu0 0.0
        %1191 = vmatpush1.msra.mxu0 0.0
        %1192 = vmatprep.subr.mxu0 0.0
        %1193 = vmatpush1.msra.mxu0 0.0
        %1194 = vmatprep.subr.mxu0 0.0
        %1195 = vmatpush1.msra.mxu0 0.0
        %1196 = vmatprep.subr.mxu0 0.0
        %1197 = vmatpush1.msra.mxu0 0.0
        %1198 = vmatprep.subr.mxu0 0.0
        %1199 = vmatpush1.msra.mxu0 0.0
        %1200 = vmatprep.subr.mxu0 0.0
        %1201 = vmatpush1.msra.mxu0 0.0
        %1202 = vmatprep.subr.mxu0 0.0
        %1203 = vmatpush1.msra.mxu0 0.0
        %1204 = vmatprep.subr.mxu0 0.0
        %1205 = vmatpush1.msra.mxu0 0.0
        %1206 = vmatprep.subr.mxu0 0.0
        %1207 = vmatpush1.msra.mxu0 0.0
        %1208 = vmatprep.subr.mxu0 0.0
        %1209 = vmatpush1.msra.mxu0 0.0
        %1210 = vmatprep.subr.mxu0 0.0
        %1211 = vmatpush1.msra.mxu0 0.0
        %1212 = vmatprep.subr.mxu0 0.0
        %1213 = vmatpush1.msra.mxu0 0.0
        %1214 = vmatprep.subr.mxu0 0.0
        %1215 = vmatpush1.msra.mxu0 0.0
        %1216 = vmatprep.subr.mxu0 0.0
        %1217 = vmatpush1.msra.mxu0 0.0
        %1218 = vmatprep.subr.mxu0 0.0
        %1219 = vmatpush1.msra.mxu0 0.0
        %1220 = vmatprep.subr.mxu0 0.0
        %1221 = vmatpush1.msra.mxu0 0.0
        %1222 = vmatprep.subr.mxu0 0.0
        %1223 = vmatpush1.msra.mxu0 0.0
        %1224 = vmatprep.subr.mxu0 0.0
        %1225 = vmatpush1.msra.mxu0 0.0
        %1226 = vmatprep.subr.mxu0 0.0
        %1227 = vmatpush1.msra.mxu0 0.0
        %1228 = vmatprep.subr.mxu0 0.0
        %1229 = vmatpush1.msra.mxu0 0.0
        %1230 = vmatprep.mubr.f32.mxu0 0.0
        %1231 = vmatmul.mubr.f32.gmra.mrb[0].mxu0 %v1164
        %v1232 = vpop.f32.mrb[0].mxu0
        %v1233 = vadd.f32 0.0, %v1232
        %v1234 = vpop.f32.mrb[0].mxu0
        %1235 = vdwg.mxu0
        %1236 = vst.msk [vmem:[%s348 + $0x4] sm:$0x1] %vm911, %v1233
        %s1237 = scalar_lea.vmem [#allocation2], 40
        %v1238 = vld [vmem:[%s1237] sm:$0xff]
        %s1239 = scalar_lea.vmem [#allocation3], 40
        %v1240 = vld [vmem:[%s1239] sm:$0xff]
        %v1241 = vmul.f32 %v1238, %v1161
        %v1242 = vadd.f32 %v1241, %v1240
        %v1243 = vld [vmem:[#allocation4 + $0x5] sm:$0x1]
        %v1245 = vsel %vm536, %v1243, 0
        %1247 = vmatprep.subr.mxu0 0.0
        %1248 = vmatpush1.msra.mxu0 %v1242
        %1249 = vmatprep.subr.mxu0 0.0
        %1250 = vmatpush1.msra.mxu0 0.0
        %1251 = vmatprep.subr.mxu0 0.0
        %1252 = vmatpush1.msra.mxu0 0.0
        %1253 = vmatprep.subr.mxu0 0.0
        %1254 = vmatpush1.msra.mxu0 0.0
        %1255 = vmatprep.subr.mxu0 0.0
        %1256 = vmatpush1.msra.mxu0 0.0
        %1257 = vmatprep.subr.mxu0 0.0
        %1258 = vmatpush1.msra.mxu0 0.0
        %1259 = vmatprep.subr.mxu0 0.0
        %1260 = vmatpush1.msra.mxu0 0.0
        %1261 = vmatprep.subr.mxu0 0.0
        %1262 = vmatpush1.msra.mxu0 0.0
        %1263 = vmatprep.subr.mxu0 0.0
        %1264 = vmatpush1.msra.mxu0 0.0
        %1265 = vmatprep.subr.mxu0 0.0
        %1266 = vmatpush1.msra.mxu0 0.0
        %1267 = vmatprep.subr.mxu0 0.0
        %1268 = vmatpush1.msra.mxu0 0.0
        %1269 = vmatprep.subr.mxu0 0.0
        %1270 = vmatpush1.msra.mxu0 0.0
        %1271 = vmatprep.subr.mxu0 0.0
        %1272 = vmatpush1.msra.mxu0 0.0
        %1273 = vmatprep.subr.mxu0 0.0
        %1274 = vmatpush1.msra.mxu0 0.0
        %1275 = vmatprep.subr.mxu0 0.0
        %1276 = vmatpush1.msra.mxu0 0.0
        %1277 = vmatprep.subr.mxu0 0.0
        %1278 = vmatpush1.msra.mxu0 0.0
        %1279 = vmatprep.subr.mxu0 0.0
        %1280 = vmatpush1.msra.mxu0 0.0
        %1281 = vmatprep.subr.mxu0 0.0
        %1282 = vmatpush1.msra.mxu0 0.0
        %1283 = vmatprep.subr.mxu0 0.0
        %1284 = vmatpush1.msra.mxu0 0.0
        %1285 = vmatprep.subr.mxu0 0.0
        %1286 = vmatpush1.msra.mxu0 0.0
        %1287 = vmatprep.subr.mxu0 0.0
        %1288 = vmatpush1.msra.mxu0 0.0
        %1289 = vmatprep.subr.mxu0 0.0
        %1290 = vmatpush1.msra.mxu0 0.0
        %1291 = vmatprep.subr.mxu0 0.0
        %1292 = vmatpush1.msra.mxu0 0.0
        %1293 = vmatprep.subr.mxu0 0.0
        %1294 = vmatpush1.msra.mxu0 0.0
        %1295 = vmatprep.subr.mxu0 0.0
        %1296 = vmatpush1.msra.mxu0 0.0
        %1297 = vmatprep.subr.mxu0 0.0
        %1298 = vmatpush1.msra.mxu0 0.0
        %1299 = vmatprep.subr.mxu0 0.0
        %1300 = vmatpush1.msra.mxu0 0.0
        %1301 = vmatprep.subr.mxu0 0.0
        %1302 = vmatpush1.msra.mxu0 0.0
        %1303 = vmatprep.subr.mxu0 0.0
        %1304 = vmatpush1.msra.mxu0 0.0
        %1305 = vmatprep.subr.mxu0 0.0
        %1306 = vmatpush1.msra.mxu0 0.0
        %1307 = vmatprep.subr.mxu0 0.0
        %1308 = vmatpush1.msra.mxu0 0.0
        %1309 = vmatprep.subr.mxu0 0.0
        %1310 = vmatpush1.msra.mxu0 0.0
        %1311 = vmatprep.mubr.f32.mxu0 0.0
        %1312 = vmatmul.mubr.f32.gmra.mrb[0].mxu0 %v1245
        %v1313 = vpop.f32.mrb[0].mxu0
        %v1314 = vadd.f32 0.0, %v1313
        %v1315 = vpop.f32.mrb[0].mxu0
        %1316 = vdwg.mxu0
        %1317 = vst.msk [vmem:[%s348 + $0x5] sm:$0x1] %vm911, %v1314
        %s1318 = scalar_lea.vmem [#allocation2], 48
        %v1319 = vld [vmem:[%s1318] sm:$0xff]
        %s1320 = scalar_lea.vmem [#allocation3], 48
        %v1321 = vld [vmem:[%s1320] sm:$0xff]
        %v1322 = vmul.f32 %v1319, %v1242
        %v1323 = vadd.f32 %v1322, %v1321
        %v1324 = vld [vmem:[#allocation4 + $0x6] sm:$0x1]
        %v1326 = vsel %vm536, %v1324, 0
        %1328 = vmatprep.subr.mxu0 0.0
        %1329 = vmatpush1.msra.mxu0 %v1323
        %1330 = vmatprep.subr.mxu0 0.0
        %1331 = vmatpush1.msra.mxu0 0.0
        %1332 = vmatprep.subr.mxu0 0.0
        %1333 = vmatpush1.msra.mxu0 0.0
        %1334 = vmatprep.subr.mxu0 0.0
        %1335 = vmatpush1.msra.mxu0 0.0
        %1336 = vmatprep.subr.mxu0 0.0
        %1337 = vmatpush1.msra.mxu0 0.0
        %1338 = vmatprep.subr.mxu0 0.0
        %1339 = vmatpush1.msra.mxu0 0.0
        %1340 = vmatprep.subr.mxu0 0.0
        %1341 = vmatpush1.msra.mxu0 0.0
        %1342 = vmatprep.subr.mxu0 0.0
        %1343 = vmatpush1.msra.mxu0 0.0
        %1344 = vmatprep.subr.mxu0 0.0
        %1345 = vmatpush1.msra.mxu0 0.0
        %1346 = vmatprep.subr.mxu0 0.0
        %1347 = vmatpush1.msra.mxu0 0.0
        %1348 = vmatprep.subr.mxu0 0.0
        %1349 = vmatpush1.msra.mxu0 0.0
        %1350 = vmatprep.subr.mxu0 0.0
        %1351 = vmatpush1.msra.mxu0 0.0
        %1352 = vmatprep.subr.mxu0 0.0
        %1353 = vmatpush1.msra.mxu0 0.0
        %1354 = vmatprep.subr.mxu0 0.0
        %1355 = vmatpush1.msra.mxu0 0.0
        %1356 = vmatprep.subr.mxu0 0.0
        %1357 = vmatpush1.msra.mxu0 0.0
        %1358 = vmatprep.subr.mxu0 0.0
        %1359 = vmatpush1.msra.mxu0 0.0
        %1360 = vmatprep.subr.mxu0 0.0
        %1361 = vmatpush1.msra.mxu0 0.0
        %1362 = vmatprep.subr.mxu0 0.0
        %1363 = vmatpush1.msra.mxu0 0.0
        %1364 = vmatprep.subr.mxu0 0.0
        %1365 = vmatpush1.msra.mxu0 0.0
        %1366 = vmatprep.subr.mxu0 0.0
        %1367 = vmatpush1.msra.mxu0 0.0
        %1368 = vmatprep.subr.mxu0 0.0
        %1369 = vmatpush1.msra.mxu0 0.0
        %1370 = vmatprep.subr.mxu0 0.0
        %1371 = vmatpush1.msra.mxu0 0.0
        %1372 = vmatprep.subr.mxu0 0.0
        %1373 = vmatpush1.msra.mxu0 0.0
        %1374 = vmatprep.subr.mxu0 0.0
        %1375 = vmatpush1.msra.mxu0 0.0
        %1376 = vmatprep.subr.mxu0 0.0
        %1377 = vmatpush1.msra.mxu0 0.0
        %1378 = vmatprep.subr.mxu0 0.0
        %1379 = vmatpush1.msra.mxu0 0.0
        %1380 = vmatprep.subr.mxu0 0.0
        %1381 = vmatpush1.msra.mxu0 0.0
        %1382 = vmatprep.subr.mxu0 0.0
        %1383 = vmatpush1.msra.mxu0 0.0
        %1384 = vmatprep.subr.mxu0 0.0
        %1385 = vmatpush1.msra.mxu0 0.0
        %1386 = vmatprep.subr.mxu0 0.0
        %1387 = vmatpush1.msra.mxu0 0.0
        %1388 = vmatprep.subr.mxu0 0.0
        %1389 = vmatpush1.msra.mxu0 0.0
        %1390 = vmatprep.subr.mxu0 0.0
        %1391 = vmatpush1.msra.mxu0 0.0
        %1392 = vmatprep.mubr.f32.mxu0 0.0
        %1393 = vmatmul.mubr.f32.gmra.mrb[0].mxu0 %v1326
        %v1394 = vpop.f32.mrb[0].mxu0
        %v1395 = vadd.f32 0.0, %v1394
        %v1396 = vpop.f32.mrb[0].mxu0
        %1397 = vdwg.mxu0
        %1398 = vst.msk [vmem:[%s348 + $0x6] sm:$0x1] %vm911, %v1395
        %s1399 = scalar_lea.vmem [#allocation2], 56
        %v1400 = vld [vmem:[%s1399] sm:$0xff]
        %s1401 = scalar_lea.vmem [#allocation3], 56
        %v1402 = vld [vmem:[%s1401] sm:$0xff]
        %v1403 = vmul.f32 %v1400, %v1323
        %v1404 = vadd.f32 %v1403, %v1402
        %v1405 = vld [vmem:[#allocation4 + $0x7] sm:$0x1]
        %v1407 = vsel %vm536, %v1405, 0
        %1409 = vmatprep.subr.mxu0 0.0
        %1410 = vmatpush1.msra.mxu0 %v1404
        %1411 = vmatprep.subr.mxu0 0.0
        %1412 = vmatpush1.msra.mxu0 0.0
        %1413 = vmatprep.subr.mxu0 0.0
        %1414 = vmatpush1.msra.mxu0 0.0
        %1415 = vmatprep.subr.mxu0 0.0
        %1416 = vmatpush1.msra.mxu0 0.0
        %1417 = vmatprep.subr.mxu0 0.0
        %1418 = vmatpush1.msra.mxu0 0.0
        %1419 = vmatprep.subr.mxu0 0.0
        %1420 = vmatpush1.msra.mxu0 0.0
        %1421 = vmatprep.subr.mxu0 0.0
        %1422 = vmatpush1.msra.mxu0 0.0
        %1423 = vmatprep.subr.mxu0 0.0
        %1424 = vmatpush1.msra.mxu0 0.0
        %1425 = vmatprep.subr.mxu0 0.0
        %1426 = vmatpush1.msra.mxu0 0.0
        %1427 = vmatprep.subr.mxu0 0.0
        %1428 = vmatpush1.msra.mxu0 0.0
        %1429 = vmatprep.subr.mxu0 0.0
        %1430 = vmatpush1.msra.mxu0 0.0
        %1431 = vmatprep.subr.mxu0 0.0
        %1432 = vmatpush1.msra.mxu0 0.0
        %1433 = vmatprep.subr.mxu0 0.0
        %1434 = vmatpush1.msra.mxu0 0.0
        %1435 = vmatprep.subr.mxu0 0.0
        %1436 = vmatpush1.msra.mxu0 0.0
        %1437 = vmatprep.subr.mxu0 0.0
        %1438 = vmatpush1.msra.mxu0 0.0
        %1439 = vmatprep.subr.mxu0 0.0
        %1440 = vmatpush1.msra.mxu0 0.0
        %1441 = vmatprep.subr.mxu0 0.0
        %1442 = vmatpush1.msra.mxu0 0.0
        %1443 = vmatprep.subr.mxu0 0.0
        %1444 = vmatpush1.msra.mxu0 0.0
        %1445 = vmatprep.subr.mxu0 0.0
        %1446 = vmatpush1.msra.mxu0 0.0
        %1447 = vmatprep.subr.mxu0 0.0
        %1448 = vmatpush1.msra.mxu0 0.0
        %1449 = vmatprep.subr.mxu0 0.0
        %1450 = vmatpush1.msra.mxu0 0.0
        %1451 = vmatprep.subr.mxu0 0.0
        %1452 = vmatpush1.msra.mxu0 0.0
        %1453 = vmatprep.subr.mxu0 0.0
        %1454 = vmatpush1.msra.mxu0 0.0
        %1455 = vmatprep.subr.mxu0 0.0
        %1456 = vmatpush1.msra.mxu0 0.0
        %1457 = vmatprep.subr.mxu0 0.0
        %1458 = vmatpush1.msra.mxu0 0.0
        %1459 = vmatprep.subr.mxu0 0.0
        %1460 = vmatpush1.msra.mxu0 0.0
        %1461 = vmatprep.subr.mxu0 0.0
        %1462 = vmatpush1.msra.mxu0 0.0
        %1463 = vmatprep.subr.mxu0 0.0
        %1464 = vmatpush1.msra.mxu0 0.0
        %1465 = vmatprep.subr.mxu0 0.0
        %1466 = vmatpush1.msra.mxu0 0.0
        %1467 = vmatprep.subr.mxu0 0.0
        %1468 = vmatpush1.msra.mxu0 0.0
        %1469 = vmatprep.subr.mxu0 0.0
        %1470 = vmatpush1.msra.mxu0 0.0
        %1471 = vmatprep.subr.mxu0 0.0
        %1472 = vmatpush1.msra.mxu0 0.0
        %1473 = vmatprep.mubr.f32.mxu0 0.0
        %1474 = vmatmul.mubr.f32.gmra.mrb[0].mxu0 %v1407
        %v1475 = vpop.f32.mrb[0].mxu0
        %v1476 = vadd.f32 0.0, %v1475
        %v1477 = vpop.f32.mrb[0].mxu0
        %1478 = vdwg.mxu0
        %1479 = vst.msk [vmem:[%s348 + $0x7] sm:$0x1] %vm911, %v1476
        %1480 = vst.msk [vmem:[#allocation5] sm:$0xff] %vm360, %v1404
        %v1481 = vld [vmem:[%s348] sm:$0xff]
        %v1482 = vld [vmem:[#allocation15] sm:$0x1]
        %v1484 = vlaneseq
        %v1485 = vshrl.u32 %v1484, 7
        %v1486 = vsub.s32 0, %v1485
        %v1487 = vrot.slane %v1482, %v1486
        %v1489 = vmul.f32 %v355, %v1487
        %v1490 = vadd.f32 %v1481, %v1489
        %1491 = vst.msk [vmem:[%s348] sm:$0xff] %vm360, %v1490
        %s1492 = sand.u32 %s181, 1
        %s1493 = scalar_lea.sflag [#allocation8], %s1492
        %s1494 = sand.u32 %s181, 1
        %s1495 = smul.addr %s1494, 8
        %s1496 = scalar_lea.vmem [#allocation17], %s1495
        // Predicated region
        $region73: #{tpu_custom_call.1} parent=43 // pred_check
          %p1497 = pneg %p191
        $region74: #{tpu_custom_call.1} parent=43 // pred_check_branch
          %1499 = sbr.rel (%p1497) target = $region76
        $region75: #{tpu_custom_call.1} parent=43 // pred_region
          %s1501 = ssub.s32 128, 128
          %1502 = vsyncadd %s1493, %s1501
          %s1503 = sadd.s32 %s31, %s30
          %s1504 = smul.addr %s1503, 128
          %s1505 = scalar_lea.hbm %s6, %s1504
          %s1507 = sshll.u32 %s1496, 4
          %s1508 = int_to_ptr.vmem [resolvable:$true] %s1507
          %1510 = dma.vmem_to_hbm [thread:$0]  %s1508, 128, %s1505, %s1493
        $region76: #{tpu_custom_call.1} parent=43 // pred_fallthru
          _
      $region44: #{tpu_custom_call.1} parent=5 // pred_fallthru
        _
      %p1511 = scmp.le.s32.totalorder 2, %s21
      // Predicated region
      $region77: #{tpu_custom_call.1} parent=5 // pred_check
        %p1512 = pneg %p1511
      $region78: #{tpu_custom_call.1} parent=5 // pred_check_branch
        %1514 = sbr.rel (%p1512) target = $region80
      $region79: #{tpu_custom_call.1} parent=5 // pred_region
        %s1515 = ssub.s32 %s21, 2
        // Predicated region
        $region81: #{tpu_custom_call.1} parent=79 // pred_check
          %p1516 = pneg %p197
        $region82: #{tpu_custom_call.1} parent=79 // pred_check_branch
          %1518 = sbr.rel (%p1516) target = $region84
        $region83: #{tpu_custom_call.1} parent=79 // pred_region
          %s1519 = sand.u32 %s182, 1
          %s1520 = scalar_lea.sflag [#allocation8], %s1519
          %s1521 = sand.u32 %s182, 1
          %s1522 = smul.addr %s1521, 8
          %s1523 = scalar_lea.vmem [#allocation17], %s1522
          %1524 = dma.done %s1520, 128
        $region84: #{tpu_custom_call.1} parent=79 // pred_fallthru
          _
      $region80: #{tpu_custom_call.1} parent=5 // pred_fallthru
        _
    $region6: #{tpu_custom_call.1} parent=1 // loop_footer
      %s25 = sadd.s32 1, %s21
    $region7: #{tpu_custom_call.1} parent=1 // loop_footer_branch
      %20 = sbr.rel target = $region3
    $region8: #{tpu_custom_call.1} parent=1 // loop_exit
      _
    %1525 = vsyncpa [#allocation7], 1
    %s1526 = scalar_lea.sflag [#allocation7], 1
    %1527 = vsyncpa %s1526, 1
    %1528 = vsyncpa [#allocation10], 1
    %1529 = vsyncpa [#allocation13], 1
    %1530 = vsyncpa [#allocation16], 1
    %1531 = vsyncpa [#allocation8], 1
    %s1532 = scalar_lea.sflag [#allocation8], 1
    %1533 = vsyncpa %s1532, 1

</llo_original>
